<compile_context>
chip_gen: v6e
topology: v6e:2x2x1
jax: 0.10.0
libtpu: 0.0.40
codegen_flags: <defaults>
</compile_context>

<pallas_src>
import jax
import jax.numpy as jnp
from jax.experimental import pallas as pl
from jax.experimental.pallas import tpu as pltpu

# ----------------------------- hyperparameters -----------------------------
INPUT_DIM = 50        # vocab size
EMBEDDING_DIM = 32
HIDDEN_DIM = 32
OUTPUT_DIM = 2
N_LAYERS = 2
N_DIRECTIONS = 1
PAD_IDX = 0
SEQ_LEN = 8
BATCH = 4
SUBLANE = 8           # f32 sublane tile


def _round_up(x, m):
    return ((x + m - 1) // m) * m


# ----------------------- fused LSTM + fc kernel ------------------------------
def make_fused_kernel(n_layers, seq_len, b_pad, hidden):
    S, Bp, H = seq_len, b_pad, hidden

    def kernel(*refs):
        # inputs
        x_ref, lens_ref = refs[0], refs[1]                 # (S*Bp, E), (Bp, 1)
        w_refs = refs[2:2 + 3 * n_layers]                  # per layer: wih^T, whh^T, bias
        fcw_ref = refs[2 + 3 * n_layers]                   # (H, OUT)
        fcb_ref = refs[3 + 3 * n_layers]                   # (1, OUT)
        # outputs / scratch
        out_ref = refs[4 + 3 * n_layers]                   # (Bp, OUT)
        proj_ref = refs[5 + 3 * n_layers]                  # (S*Bp, 4H) scratch
        allh_ref = refs[6 + 3 * n_layers]                  # (S*Bp, H)  scratch

        lens = lens_ref[...]                               # (Bp, 1) int32

        # Single-tanh gate activation:
        #   sigmoid(z) = 0.5 + 0.5 * tanh(0.5 * z)    (i, f, o lanes)
        #   tanh(z)    = 0.0 + 1.0 * tanh(1.0 * z)    (g lanes: [2H, 3H))
        # The 0.5 pre-scale is folded into proj / W_hh once per layer, so the
        # serial per-step path has only one EUP tanh for the gates.
        lane = jax.lax.broadcasted_iota(jnp.int32, (1, 4 * H), 1)
        is_g = (lane >= 2 * H) & (lane < 3 * H)
        scale_row = jnp.where(is_g, 1.0, 0.5)              # (1, 4H)
        # hoisted full-width broadcasts (JAX does not CSE broadcast_in_dim)
        post_scale = jnp.broadcast_to(scale_row, (Bp, 4 * H))
        post_off = jnp.broadcast_to(jnp.where(is_g, 0.0, 0.5), (Bp, 4 * H))

        h_last = None
        layer_in_ref = x_ref
        for l in range(n_layers):
            wih_ref = w_refs[3 * l + 0]
            whh_ref = w_refs[3 * l + 1]
            b_ref = w_refs[3 * l + 2]
            last_layer = (l == n_layers - 1)

            # Hoisted input projection for ALL timesteps of this layer:
            # (S*Bp, Din) @ (Din, 4H) + bias -> one big MXU op off the serial
            # path, pre-scaled for the single-tanh trick.
            proj_ref[...] = (
                jnp.dot(layer_in_ref[...], wih_ref[...],
                        preferred_element_type=jnp.float32)
                + b_ref[...]) * scale_row

            whh = whh_ref[...] * scale_row                 # (H, 4H), resident, pre-scaled

            h = jnp.zeros((Bp, H), jnp.float32)
            c = jnp.zeros((Bp, H), jnp.float32)
            for t in range(S):                             # static -> zero-cost slices
                row = t * Bp
                gates = (proj_ref[row:row + Bp, :]
                         + jnp.dot(h, whh, preferred_element_type=jnp.float32))
                act = post_off + post_scale * jnp.tanh(gates)   # one EUP tanh
                i_g = act[:, 0 * H:1 * H]
                f_g = act[:, 1 * H:2 * H]
                g_g = act[:, 2 * H:3 * H]
                o_g = act[:, 3 * H:4 * H]
                c_new = f_g * c + i_g * g_g
                h_new = o_g * jnp.tanh(c_new)
                # pack_padded_sequence semantics: freeze state once t >= length
                valid = t < lens                           # (Bp, 1) bool
                h = jnp.where(valid, h_new, h)
                c = jnp.where(valid, c_new, c)
                if not last_layer:
                    # per-step hidden -> next layer's input (stays in VMEM)
                    allh_ref[row:row + Bp, :] = h
            h_last = h
            layer_in_ref = allh_ref

        # fused fc epilogue: logits = h_last @ fc_w^T + fc_b
        out_ref[...] = (jnp.dot(h_last, fcw_ref[...],
                                preferred_element_type=jnp.float32)
                        + fcb_ref[...])

    return kernel


# ----------------------------- full model forward ---------------------------
def lstm_model_forward(params, text, text_lengths):
    S, B = text.shape
    Bp = _round_up(max(B, SUBLANE), SUBLANE)
    H = HIDDEN_DIM

    # Embedding lookup (single XLA gather) + eval-mode dropout (identity).
    # TODO(synk): training-mode dropout not implemented (eval-mode identity);
    #             embedding gather left to XLA rather than an in-kernel scalar loop.
    emb = jnp.take(params["embedding"], text, axis=0).astype(jnp.float32)  # (S, B, E)

    # Pad batch to the f32 sublane tile (8); padded rows get length 0.
    pad_b = Bp - B
    emb = jnp.pad(emb, ((0, 0), (0, pad_b), (0, 0)))
    x = emb.reshape(S * Bp, EMBEDDING_DIM)                                  # (S*Bp, E)
    lens = jnp.pad(text_lengths.astype(jnp.int32), (0, pad_b)).reshape(Bp, 1)

    # Pre-transpose weights so in-kernel matmuls are plain row-major MXU dots.
    args = [x, lens]
    for l in range(N_LAYERS):
        args.append(jnp.asarray(params[f"w_ih_l{l}"].T, jnp.float32))       # (Din, 4H)
        args.append(jnp.asarray(params[f"w_hh_l{l}"].T, jnp.float32))       # (H, 4H)
        args.append((params[f"b_ih_l{l}"] + params[f"b_hh_l{l}"])
                    .reshape(1, 4 * H).astype(jnp.float32))                 # (1, 4H)
    args.append(jnp.asarray(params["fc_w"].T, jnp.float32))                 # (H, OUT)
    args.append(params["fc_b"].reshape(1, OUTPUT_DIM).astype(jnp.float32))  # (1, OUT)

    kernel = make_fused_kernel(N_LAYERS, S, Bp, H)
    out_p = pl.pallas_call(
        kernel,
        out_shape=jax.ShapeDtypeStruct((Bp, OUTPUT_DIM), jnp.float32),
        in_specs=[pl.BlockSpec(memory_space=pltpu.MemorySpace.VMEM)] * len(args),
        out_specs=pl.BlockSpec(memory_space=pltpu.MemorySpace.VMEM),
        scratch_shapes=[
            pltpu.VMEM((S * Bp, 4 * H), jnp.float32),   # hoisted input projections
            pltpu.VMEM((S * Bp, H), jnp.float32),       # all-step hidden of prev layer
        ],
    )(*args)
    return out_p[:B]


# ----------------------------- parameter init -------------------------------
def init_params(key):
    keys = jax.random.split(key, 3 + 4 * N_LAYERS)
    params = {}
    emb = jax.random.normal(keys[0], (INPUT_DIM, EMBEDDING_DIM), jnp.float32)
    params["embedding"] = emb.at[PAD_IDX].set(0.0)   # padding_idx semantics

    k = 1.0 / jnp.sqrt(HIDDEN_DIM)
    ki = 1
    for l in range(N_LAYERS):
        in_dim = EMBEDDING_DIM if l == 0 else HIDDEN_DIM
        params[f"w_ih_l{l}"] = jax.random.uniform(
            keys[ki], (4 * HIDDEN_DIM, in_dim), jnp.float32, -k, k); ki += 1
        params[f"w_hh_l{l}"] = jax.random.uniform(
            keys[ki], (4 * HIDDEN_DIM, HIDDEN_DIM), jnp.float32, -k, k); ki += 1
        params[f"b_ih_l{l}"] = jax.random.uniform(
            keys[ki], (4 * HIDDEN_DIM,), jnp.float32, -k, k); ki += 1
        params[f"b_hh_l{l}"] = jax.random.uniform(
            keys[ki], (4 * HIDDEN_DIM,), jnp.float32, -k, k); ki += 1

    kf = 1.0 / jnp.sqrt(HIDDEN_DIM * N_DIRECTIONS)
    params["fc_w"] = jax.random.uniform(
        keys[ki], (OUTPUT_DIM, HIDDEN_DIM * N_DIRECTIONS), jnp.float32, -kf, kf)
    params["fc_b"] = jax.random.uniform(
        keys[ki + 1], (OUTPUT_DIM,), jnp.float32, -kf, kf)
    return params


# ----------------------------- main ------------------------------------------
if __name__ == "__main__":
    key = jax.random.PRNGKey(0)
    pkey, tkey = jax.random.split(key)
    params = init_params(pkey)

    # text: (seq_len, batch) tokens; lengths sorted descending (pack convention)
    text_lengths = jnp.array([SEQ_LEN, 6, 5, 3], dtype=jnp.int32)
    tokens = jax.random.randint(tkey, (SEQ_LEN, BATCH), 1, INPUT_DIM, jnp.int32)
    pos = jnp.arange(SEQ_LEN)[:, None]
    text = jnp.where(pos < text_lengths[None, :], tokens, PAD_IDX)  # pad tail

    out = jax.jit(lstm_model_forward)(params, text, text_lengths)
    out = jax.block_until_ready(out)
    assert out.shape == (BATCH, OUTPUT_DIM)
    assert jnp.all(jnp.isfinite(out))
    print("KERNEL_OK")
</pallas_src>

<mosaic_0001>
module attributes {stable_mosaic.version = 11 : i64} {
  func.func @kernel(%arg0: memref<64x32xf32, #tpu.memory_space<vmem>>, %arg1: memref<8x1xi32, #tpu.memory_space<vmem>>, %arg2: memref<32x128xf32, #tpu.memory_space<vmem>>, %arg3: memref<32x128xf32, #tpu.memory_space<vmem>>, %arg4: memref<1x128xf32, #tpu.memory_space<vmem>>, %arg5: memref<32x128xf32, #tpu.memory_space<vmem>>, %arg6: memref<32x128xf32, #tpu.memory_space<vmem>>, %arg7: memref<1x128xf32, #tpu.memory_space<vmem>>, %arg8: memref<32x2xf32, #tpu.memory_space<vmem>>, %arg9: memref<1x2xf32, #tpu.memory_space<vmem>>, %arg10: memref<8x2xf32, #tpu.memory_space<vmem>>, %arg11: memref<64x128xf32, #tpu.memory_space<vmem>>, %arg12: memref<64x32xf32, #tpu.memory_space<vmem>>) attributes {dimension_semantics = [], scalar_prefetch = 0 : i64, scratch_operands = 2 : i64, tpu.core_type = #tpu.core_type<tc>} {
    %c0 = arith.constant 0 : index
    %c0_0 = arith.constant 0 : index
    %0 = vector.load %arg1[%c0, %c0_0] : memref<8x1xi32, #tpu.memory_space<vmem>>, vector<8x1xi32>
    %1 = tpu.iota {dimensions = array<i32: 1>} : vector<1x128xi32>
    %c64_i32 = arith.constant 64 : i32
    %2 = vector.broadcast %c64_i32 : i32 to vector<1x128xi32>
    %3 = arith.cmpi sge, %1, %2 : vector<1x128xi32>
    %c96_i32 = arith.constant 96 : i32
    %4 = vector.broadcast %c96_i32 : i32 to vector<1x128xi32>
    %5 = arith.cmpi slt, %1, %4 : vector<1x128xi32>
    %6 = arith.andi %3, %5 : vector<1x128xi1>
    %cst = arith.constant 1.000000e+00 : f32
    %cst_1 = arith.constant 5.000000e-01 : f32
    %7 = vector.broadcast %cst : f32 to vector<1x128xf32>
    %8 = vector.broadcast %cst_1 : f32 to vector<1x128xf32>
    %9 = arith.select %6, %7, %8 : vector<1x128xi1>, vector<1x128xf32>
    %10 = vector.shape_cast %9 : vector<1x128xf32> to vector<1x128xf32>
    %11 = vector.broadcast %10 : vector<1x128xf32> to vector<8x128xf32>
    %cst_2 = arith.constant 0.000000e+00 : f32
    %cst_3 = arith.constant 5.000000e-01 : f32
    %12 = vector.broadcast %cst_2 : f32 to vector<1x128xf32>
    %13 = vector.broadcast %cst_3 : f32 to vector<1x128xf32>
    %14 = arith.select %6, %12, %13 : vector<1x128xi1>, vector<1x128xf32>
    %15 = vector.shape_cast %14 : vector<1x128xf32> to vector<1x128xf32>
    %16 = vector.broadcast %15 : vector<1x128xf32> to vector<8x128xf32>
    %c0_4 = arith.constant 0 : index
    %c0_5 = arith.constant 0 : index
    %17 = vector.load %arg0[%c0_4, %c0_5] : memref<64x32xf32, #tpu.memory_space<vmem>>, vector<64x32xf32>
    %c0_6 = arith.constant 0 : index
    %c0_7 = arith.constant 0 : index
    %18 = vector.load %arg2[%c0_6, %c0_7] : memref<32x128xf32, #tpu.memory_space<vmem>>, vector<32x128xf32>
    %cst_8 = arith.constant dense<0.000000e+00> : vector<64x128xf32>
    %19 = tpu.matmul %17, %18, %cst_8 {dimension_numbers = #tpu.dot_dimension_numbers<[1], [0], [0], [1], [0, 0, 1, 1], [], []>} : vector<64x32xf32>, vector<32x128xf32>, vector<64x128xf32> -> vector<64x128xf32>
    %c0_9 = arith.constant 0 : index
    %c0_10 = arith.constant 0 : index
    %20 = vector.load %arg4[%c0_9, %c0_10] : memref<1x128xf32, #tpu.memory_space<vmem>>, vector<1x128xf32>
    %21 = vector.broadcast %20 : vector<1x128xf32> to vector<64x128xf32>
    %22 = arith.addf %19, %21 : vector<64x128xf32>
    %23 = vector.broadcast %9 : vector<1x128xf32> to vector<64x128xf32>
    %24 = arith.mulf %22, %23 : vector<64x128xf32>
    %c0_11 = arith.constant 0 : index
    %c0_12 = arith.constant 0 : index
    %25 = vector.load %arg11[%c0_11, %c0_12] : memref<64x128xf32, #tpu.memory_space<vmem>>, vector<64x128xf32>
    tpu.vector_store %arg11[%c0_11, %c0_12], %24 {strides = array<i32>} : memref<64x128xf32, #tpu.memory_space<vmem>>, vector<64x128xf32>,
    %c0_13 = arith.constant 0 : index
    %c0_14 = arith.constant 0 : index
    %26 = vector.load %arg3[%c0_13, %c0_14] : memref<32x128xf32, #tpu.memory_space<vmem>>, vector<32x128xf32>
    %27 = vector.broadcast %9 : vector<1x128xf32> to vector<32x128xf32>
    %28 = arith.mulf %26, %27 : vector<32x128xf32>
    %cst_15 = arith.constant 0.000000e+00 : f32
    %29 = vector.broadcast %cst_15 : f32 to vector<8x32xf32>
    %cst_16 = arith.constant 0.000000e+00 : f32
    %30 = vector.broadcast %cst_16 : f32 to vector<8x32xf32>
    %c0_17 = arith.constant 0 : index
    %c0_18 = arith.constant 0 : index
    %31 = vector.load %arg11[%c0_17, %c0_18] : memref<64x128xf32, #tpu.memory_space<vmem>>, vector<8x128xf32>
    %cst_19 = arith.constant dense<0.000000e+00> : vector<8x128xf32>
    %32 = tpu.matmul %29, %28, %cst_19 {dimension_numbers = #tpu.dot_dimension_numbers<[1], [0], [0], [1], [0, 0, 1, 1], [], []>} : vector<8x32xf32>, vector<32x128xf32>, vector<8x128xf32> -> vector<8x128xf32>
    %33 = arith.addf %31, %32 : vector<8x128xf32>
    %34 = math.tanh %33 : vector<8x128xf32>
    %35 = arith.mulf %11, %34 : vector<8x128xf32>
    %36 = arith.addf %16, %35 : vector<8x128xf32>
    %37 = vector.extract_strided_slice %36 {offsets = [0, 0], sizes = [8, 32], strides = [1, 1]} : vector<8x128xf32> to vector<8x32xf32>
    %38 = vector.extract_strided_slice %36 {offsets = [0, 32], sizes = [8, 32], strides = [1, 1]} : vector<8x128xf32> to vector<8x32xf32>
    %39 = vector.extract_strided_slice %36 {offsets = [0, 64], sizes = [8, 32], strides = [1, 1]} : vector<8x128xf32> to vector<8x32xf32>
    %40 = vector.extract_strided_slice %36 {offsets = [0, 96], sizes = [8, 32], strides = [1, 1]} : vector<8x128xf32> to vector<8x32xf32>
    %41 = arith.mulf %38, %30 : vector<8x32xf32>
    %42 = arith.mulf %37, %39 : vector<8x32xf32>
    %43 = arith.addf %41, %42 : vector<8x32xf32>
    %44 = math.tanh %43 : vector<8x32xf32>
    %45 = arith.mulf %40, %44 : vector<8x32xf32>
    %c0_i32 = arith.constant 0 : i32
    %46 = vector.broadcast %c0_i32 : i32 to vector<8x1xi32>
    %47 = arith.cmpi sgt, %0, %46 : vector<8x1xi32>
    %48 = vector.shape_cast %47 : vector<8x1xi1> to vector<8x1xi1>
    %49 = vector.broadcast %48 : vector<8x1xi1> to vector<8x32xi1>
    %50 = arith.select %49, %45, %29 : vector<8x32xi1>, vector<8x32xf32>
    %51 = vector.shape_cast %47 : vector<8x1xi1> to vector<8x1xi1>
    %52 = vector.broadcast %51 : vector<8x1xi1> to vector<8x32xi1>
    %53 = arith.select %52, %43, %30 : vector<8x32xi1>, vector<8x32xf32>
    %c0_20 = arith.constant 0 : index
    %c0_21 = arith.constant 0 : index
    %54 = vector.load %arg12[%c0_20, %c0_21] : memref<64x32xf32, #tpu.memory_space<vmem>>, vector<8x32xf32>
    tpu.vector_store %arg12[%c0_20, %c0_21], %50 {strides = array<i32>} : memref<64x32xf32, #tpu.memory_space<vmem>>, vector<8x32xf32>,
    %c8 = arith.constant 8 : index
    %c0_22 = arith.constant 0 : index
    %55 = vector.load %arg11[%c8, %c0_22] : memref<64x128xf32, #tpu.memory_space<vmem>>, vector<8x128xf32>
    %cst_23 = arith.constant dense<0.000000e+00> : vector<8x128xf32>
    %56 = tpu.matmul %50, %28, %cst_23 {dimension_numbers = #tpu.dot_dimension_numbers<[1], [0], [0], [1], [0, 0, 1, 1], [], []>} : vector<8x32xf32>, vector<32x128xf32>, vector<8x128xf32> -> vector<8x128xf32>
    %57 = arith.addf %55, %56 : vector<8x128xf32>
    %58 = math.tanh %57 : vector<8x128xf32>
    %59 = arith.mulf %11, %58 : vector<8x128xf32>
    %60 = arith.addf %16, %59 : vector<8x128xf32>
    %61 = vector.extract_strided_slice %60 {offsets = [0, 0], sizes = [8, 32], strides = [1, 1]} : vector<8x128xf32> to vector<8x32xf32>
    %62 = vector.extract_strided_slice %60 {offsets = [0, 32], sizes = [8, 32], strides = [1, 1]} : vector<8x128xf32> to vector<8x32xf32>
    %63 = vector.extract_strided_slice %60 {offsets = [0, 64], sizes = [8, 32], strides = [1, 1]} : vector<8x128xf32> to vector<8x32xf32>
    %64 = vector.extract_strided_slice %60 {offsets = [0, 96], sizes = [8, 32], strides = [1, 1]} : vector<8x128xf32> to vector<8x32xf32>
    %65 = arith.mulf %62, %53 : vector<8x32xf32>
    %66 = arith.mulf %61, %63 : vector<8x32xf32>
    %67 = arith.addf %65, %66 : vector<8x32xf32>
    %68 = math.tanh %67 : vector<8x32xf32>
    %69 = arith.mulf %64, %68 : vector<8x32xf32>
    %c1_i32 = arith.constant 1 : i32
    %70 = vector.broadcast %c1_i32 : i32 to vector<8x1xi32>
    %71 = arith.cmpi sgt, %0, %70 : vector<8x1xi32>
    %72 = vector.shape_cast %71 : vector<8x1xi1> to vector<8x1xi1>
    %73 = vector.broadcast %72 : vector<8x1xi1> to vector<8x32xi1>
    %74 = arith.select %73, %69, %50 : vector<8x32xi1>, vector<8x32xf32>
    %75 = vector.shape_cast %71 : vector<8x1xi1> to vector<8x1xi1>
    %76 = vector.broadcast %75 : vector<8x1xi1> to vector<8x32xi1>
    %77 = arith.select %76, %67, %53 : vector<8x32xi1>, vector<8x32xf32>
    %c8_24 = arith.constant 8 : index
    %c0_25 = arith.constant 0 : index
    %78 = vector.load %arg12[%c8_24, %c0_25] : memref<64x32xf32, #tpu.memory_space<vmem>>, vector<8x32xf32>
    tpu.vector_store %arg12[%c8_24, %c0_25], %74 {strides = array<i32>} : memref<64x32xf32, #tpu.memory_space<vmem>>, vector<8x32xf32>,
    %c16 = arith.constant 16 : index
    %c0_26 = arith.constant 0 : index
    %79 = vector.load %arg11[%c16, %c0_26] : memref<64x128xf32, #tpu.memory_space<vmem>>, vector<8x128xf32>
    %cst_27 = arith.constant dense<0.000000e+00> : vector<8x128xf32>
    %80 = tpu.matmul %74, %28, %cst_27 {dimension_numbers = #tpu.dot_dimension_numbers<[1], [0], [0], [1], [0, 0, 1, 1], [], []>} : vector<8x32xf32>, vector<32x128xf32>, vector<8x128xf32> -> vector<8x128xf32>
    %81 = arith.addf %79, %80 : vector<8x128xf32>
    %82 = math.tanh %81 : vector<8x128xf32>
    %83 = arith.mulf %11, %82 : vector<8x128xf32>
    %84 = arith.addf %16, %83 : vector<8x128xf32>
    %85 = vector.extract_strided_slice %84 {offsets = [0, 0], sizes = [8, 32], strides = [1, 1]} : vector<8x128xf32> to vector<8x32xf32>
    %86 = vector.extract_strided_slice %84 {offsets = [0, 32], sizes = [8, 32], strides = [1, 1]} : vector<8x128xf32> to vector<8x32xf32>
    %87 = vector.extract_strided_slice %84 {offsets = [0, 64], sizes = [8, 32], strides = [1, 1]} : vector<8x128xf32> to vector<8x32xf32>
    %88 = vector.extract_strided_slice %84 {offsets = [0, 96], sizes = [8, 32], strides = [1, 1]} : vector<8x128xf32> to vector<8x32xf32>
    %89 = arith.mulf %86, %77 : vector<8x32xf32>
    %90 = arith.mulf %85, %87 : vector<8x32xf32>
    %91 = arith.addf %89, %90 : vector<8x32xf32>
    %92 = math.tanh %91 : vector<8x32xf32>
    %93 = arith.mulf %88, %92 : vector<8x32xf32>
    %c2_i32 = arith.constant 2 : i32
    %94 = vector.broadcast %c2_i32 : i32 to vector<8x1xi32>
    %95 = arith.cmpi sgt, %0, %94 : vector<8x1xi32>
    %96 = vector.shape_cast %95 : vector<8x1xi1> to vector<8x1xi1>
    %97 = vector.broadcast %96 : vector<8x1xi1> to vector<8x32xi1>
    %98 = arith.select %97, %93, %74 : vector<8x32xi1>, vector<8x32xf32>
    %99 = vector.shape_cast %95 : vector<8x1xi1> to vector<8x1xi1>
    %100 = vector.broadcast %99 : vector<8x1xi1> to vector<8x32xi1>
    %101 = arith.select %100, %91, %77 : vector<8x32xi1>, vector<8x32xf32>
    %c16_28 = arith.constant 16 : index
    %c0_29 = arith.constant 0 : index
    %102 = vector.load %arg12[%c16_28, %c0_29] : memref<64x32xf32, #tpu.memory_space<vmem>>, vector<8x32xf32>
    tpu.vector_store %arg12[%c16_28, %c0_29], %98 {strides = array<i32>} : memref<64x32xf32, #tpu.memory_space<vmem>>, vector<8x32xf32>,
    %c24 = arith.constant 24 : index
    %c0_30 = arith.constant 0 : index
    %103 = vector.load %arg11[%c24, %c0_30] : memref<64x128xf32, #tpu.memory_space<vmem>>, vector<8x128xf32>
    %cst_31 = arith.constant dense<0.000000e+00> : vector<8x128xf32>
    %104 = tpu.matmul %98, %28, %cst_31 {dimension_numbers = #tpu.dot_dimension_numbers<[1], [0], [0], [1], [0, 0, 1, 1], [], []>} : vector<8x32xf32>, vector<32x128xf32>, vector<8x128xf32> -> vector<8x128xf32>
    %105 = arith.addf %103, %104 : vector<8x128xf32>
    %106 = math.tanh %105 : vector<8x128xf32>
    %107 = arith.mulf %11, %106 : vector<8x128xf32>
    %108 = arith.addf %16, %107 : vector<8x128xf32>
    %109 = vector.extract_strided_slice %108 {offsets = [0, 0], sizes = [8, 32], strides = [1, 1]} : vector<8x128xf32> to vector<8x32xf32>
    %110 = vector.extract_strided_slice %108 {offsets = [0, 32], sizes = [8, 32], strides = [1, 1]} : vector<8x128xf32> to vector<8x32xf32>
    %111 = vector.extract_strided_slice %108 {offsets = [0, 64], sizes = [8, 32], strides = [1, 1]} : vector<8x128xf32> to vector<8x32xf32>
    %112 = vector.extract_strided_slice %108 {offsets = [0, 96], sizes = [8, 32], strides = [1, 1]} : vector<8x128xf32> to vector<8x32xf32>
    %113 = arith.mulf %110, %101 : vector<8x32xf32>
    %114 = arith.mulf %109, %111 : vector<8x32xf32>
    %115 = arith.addf %113, %114 : vector<8x32xf32>
    %116 = math.tanh %115 : vector<8x32xf32>
    %117 = arith.mulf %112, %116 : vector<8x32xf32>
    %c3_i32 = arith.constant 3 : i32
    %118 = vector.broadcast %c3_i32 : i32 to vector<8x1xi32>
    %119 = arith.cmpi sgt, %0, %118 : vector<8x1xi32>
    %120 = vector.shape_cast %119 : vector<8x1xi1> to vector<8x1xi1>
    %121 = vector.broadcast %120 : vector<8x1xi1> to vector<8x32xi1>
    %122 = arith.select %121, %117, %98 : vector<8x32xi1>, vector<8x32xf32>
    %123 = vector.shape_cast %119 : vector<8x1xi1> to vector<8x1xi1>
    %124 = vector.broadcast %123 : vector<8x1xi1> to vector<8x32xi1>
    %125 = arith.select %124, %115, %101 : vector<8x32xi1>, vector<8x32xf32>
    %c24_32 = arith.constant 24 : index
    %c0_33 = arith.constant 0 : index
    %126 = vector.load %arg12[%c24_32, %c0_33] : memref<64x32xf32, #tpu.memory_space<vmem>>, vector<8x32xf32>
    tpu.vector_store %arg12[%c24_32, %c0_33], %122 {strides = array<i32>} : memref<64x32xf32, #tpu.memory_space<vmem>>, vector<8x32xf32>,
    %c32 = arith.constant 32 : index
    %c0_34 = arith.constant 0 : index
    %127 = vector.load %arg11[%c32, %c0_34] : memref<64x128xf32, #tpu.memory_space<vmem>>, vector<8x128xf32>
    %cst_35 = arith.constant dense<0.000000e+00> : vector<8x128xf32>
    %128 = tpu.matmul %122, %28, %cst_35 {dimension_numbers = #tpu.dot_dimension_numbers<[1], [0], [0], [1], [0, 0, 1, 1], [], []>} : vector<8x32xf32>, vector<32x128xf32>, vector<8x128xf32> -> vector<8x128xf32>
    %129 = arith.addf %127, %128 : vector<8x128xf32>
    %130 = math.tanh %129 : vector<8x128xf32>
    %131 = arith.mulf %11, %130 : vector<8x128xf32>
    %132 = arith.addf %16, %131 : vector<8x128xf32>
    %133 = vector.extract_strided_slice %132 {offsets = [0, 0], sizes = [8, 32], strides = [1, 1]} : vector<8x128xf32> to vector<8x32xf32>
    %134 = vector.extract_strided_slice %132 {offsets = [0, 32], sizes = [8, 32], strides = [1, 1]} : vector<8x128xf32> to vector<8x32xf32>
    %135 = vector.extract_strided_slice %132 {offsets = [0, 64], sizes = [8, 32], strides = [1, 1]} : vector<8x128xf32> to vector<8x32xf32>
    %136 = vector.extract_strided_slice %132 {offsets = [0, 96], sizes = [8, 32], strides = [1, 1]} : vector<8x128xf32> to vector<8x32xf32>
    %137 = arith.mulf %134, %125 : vector<8x32xf32>
    %138 = arith.mulf %133, %135 : vector<8x32xf32>
    %139 = arith.addf %137, %138 : vector<8x32xf32>
    %140 = math.tanh %139 : vector<8x32xf32>
    %141 = arith.mulf %136, %140 : vector<8x32xf32>
    %c4_i32 = arith.constant 4 : i32
    %142 = vector.broadcast %c4_i32 : i32 to vector<8x1xi32>
    %143 = arith.cmpi sgt, %0, %142 : vector<8x1xi32>
    %144 = vector.shape_cast %143 : vector<8x1xi1> to vector<8x1xi1>
    %145 = vector.broadcast %144 : vector<8x1xi1> to vector<8x32xi1>
    %146 = arith.select %145, %141, %122 : vector<8x32xi1>, vector<8x32xf32>
    %147 = vector.shape_cast %143 : vector<8x1xi1> to vector<8x1xi1>
    %148 = vector.broadcast %147 : vector<8x1xi1> to vector<8x32xi1>
    %149 = arith.select %148, %139, %125 : vector<8x32xi1>, vector<8x32xf32>
    %c32_36 = arith.constant 32 : index
    %c0_37 = arith.constant 0 : index
    %150 = vector.load %arg12[%c32_36, %c0_37] : memref<64x32xf32, #tpu.memory_space<vmem>>, vector<8x32xf32>
    tpu.vector_store %arg12[%c32_36, %c0_37], %146 {strides = array<i32>} : memref<64x32xf32, #tpu.memory_space<vmem>>, vector<8x32xf32>,
    %c40 = arith.constant 40 : index
    %c0_38 = arith.constant 0 : index
    %151 = vector.load %arg11[%c40, %c0_38] : memref<64x128xf32, #tpu.memory_space<vmem>>, vector<8x128xf32>
    %cst_39 = arith.constant dense<0.000000e+00> : vector<8x128xf32>
    %152 = tpu.matmul %146, %28, %cst_39 {dimension_numbers = #tpu.dot_dimension_numbers<[1], [0], [0], [1], [0, 0, 1, 1], [], []>} : vector<8x32xf32>, vector<32x128xf32>, vector<8x128xf32> -> vector<8x128xf32>
    %153 = arith.addf %151, %152 : vector<8x128xf32>
    %154 = math.tanh %153 : vector<8x128xf32>
    %155 = arith.mulf %11, %154 : vector<8x128xf32>
    %156 = arith.addf %16, %155 : vector<8x128xf32>
    %157 = vector.extract_strided_slice %156 {offsets = [0, 0], sizes = [8, 32], strides = [1, 1]} : vector<8x128xf32> to vector<8x32xf32>
    %158 = vector.extract_strided_slice %156 {offsets = [0, 32], sizes = [8, 32], strides = [1, 1]} : vector<8x128xf32> to vector<8x32xf32>
    %159 = vector.extract_strided_slice %156 {offsets = [0, 64], sizes = [8, 32], strides = [1, 1]} : vector<8x128xf32> to vector<8x32xf32>
    %160 = vector.extract_strided_slice %156 {offsets = [0, 96], sizes = [8, 32], strides = [1, 1]} : vector<8x128xf32> to vector<8x32xf32>
    %161 = arith.mulf %158, %149 : vector<8x32xf32>
    %162 = arith.mulf %157, %159 : vector<8x32xf32>
    %163 = arith.addf %161, %162 : vector<8x32xf32>
    %164 = math.tanh %163 : vector<8x32xf32>
    %165 = arith.mulf %160, %164 : vector<8x32xf32>
    %c5_i32 = arith.constant 5 : i32
    %166 = vector.broadcast %c5_i32 : i32 to vector<8x1xi32>
    %167 = arith.cmpi sgt, %0, %166 : vector<8x1xi32>
    %168 = vector.shape_cast %167 : vector<8x1xi1> to vector<8x1xi1>
    %169 = vector.broadcast %168 : vector<8x1xi1> to vector<8x32xi1>
    %170 = arith.select %169, %165, %146 : vector<8x32xi1>, vector<8x32xf32>
    %171 = vector.shape_cast %167 : vector<8x1xi1> to vector<8x1xi1>
    %172 = vector.broadcast %171 : vector<8x1xi1> to vector<8x32xi1>
    %173 = arith.select %172, %163, %149 : vector<8x32xi1>, vector<8x32xf32>
    %c40_40 = arith.constant 40 : index
    %c0_41 = arith.constant 0 : index
    %174 = vector.load %arg12[%c40_40, %c0_41] : memref<64x32xf32, #tpu.memory_space<vmem>>, vector<8x32xf32>
    tpu.vector_store %arg12[%c40_40, %c0_41], %170 {strides = array<i32>} : memref<64x32xf32, #tpu.memory_space<vmem>>, vector<8x32xf32>,
    %c48 = arith.constant 48 : index
    %c0_42 = arith.constant 0 : index
    %175 = vector.load %arg11[%c48, %c0_42] : memref<64x128xf32, #tpu.memory_space<vmem>>, vector<8x128xf32>
    %cst_43 = arith.constant dense<0.000000e+00> : vector<8x128xf32>
    %176 = tpu.matmul %170, %28, %cst_43 {dimension_numbers = #tpu.dot_dimension_numbers<[1], [0], [0], [1], [0, 0, 1, 1], [], []>} : vector<8x32xf32>, vector<32x128xf32>, vector<8x128xf32> -> vector<8x128xf32>
    %177 = arith.addf %175, %176 : vector<8x128xf32>
    %178 = math.tanh %177 : vector<8x128xf32>
    %179 = arith.mulf %11, %178 : vector<8x128xf32>
    %180 = arith.addf %16, %179 : vector<8x128xf32>
    %181 = vector.extract_strided_slice %180 {offsets = [0, 0], sizes = [8, 32], strides = [1, 1]} : vector<8x128xf32> to vector<8x32xf32>
    %182 = vector.extract_strided_slice %180 {offsets = [0, 32], sizes = [8, 32], strides = [1, 1]} : vector<8x128xf32> to vector<8x32xf32>
    %183 = vector.extract_strided_slice %180 {offsets = [0, 64], sizes = [8, 32], strides = [1, 1]} : vector<8x128xf32> to vector<8x32xf32>
    %184 = vector.extract_strided_slice %180 {offsets = [0, 96], sizes = [8, 32], strides = [1, 1]} : vector<8x128xf32> to vector<8x32xf32>
    %185 = arith.mulf %182, %173 : vector<8x32xf32>
    %186 = arith.mulf %181, %183 : vector<8x32xf32>
    %187 = arith.addf %185, %186 : vector<8x32xf32>
    %188 = math.tanh %187 : vector<8x32xf32>
    %189 = arith.mulf %184, %188 : vector<8x32xf32>
    %c6_i32 = arith.constant 6 : i32
    %190 = vector.broadcast %c6_i32 : i32 to vector<8x1xi32>
    %191 = arith.cmpi sgt, %0, %190 : vector<8x1xi32>
    %192 = vector.shape_cast %191 : vector<8x1xi1> to vector<8x1xi1>
    %193 = vector.broadcast %192 : vector<8x1xi1> to vector<8x32xi1>
    %194 = arith.select %193, %189, %170 : vector<8x32xi1>, vector<8x32xf32>
    %195 = vector.shape_cast %191 : vector<8x1xi1> to vector<8x1xi1>
    %196 = vector.broadcast %195 : vector<8x1xi1> to vector<8x32xi1>
    %197 = arith.select %196, %187, %173 : vector<8x32xi1>, vector<8x32xf32>
    %c48_44 = arith.constant 48 : index
    %c0_45 = arith.constant 0 : index
    %198 = vector.load %arg12[%c48_44, %c0_45] : memref<64x32xf32, #tpu.memory_space<vmem>>, vector<8x32xf32>
    tpu.vector_store %arg12[%c48_44, %c0_45], %194 {strides = array<i32>} : memref<64x32xf32, #tpu.memory_space<vmem>>, vector<8x32xf32>,
    %c56 = arith.constant 56 : index
    %c0_46 = arith.constant 0 : index
    %199 = vector.load %arg11[%c56, %c0_46] : memref<64x128xf32, #tpu.memory_space<vmem>>, vector<8x128xf32>
    %cst_47 = arith.constant dense<0.000000e+00> : vector<8x128xf32>
    %200 = tpu.matmul %194, %28, %cst_47 {dimension_numbers = #tpu.dot_dimension_numbers<[1], [0], [0], [1], [0, 0, 1, 1], [], []>} : vector<8x32xf32>, vector<32x128xf32>, vector<8x128xf32> -> vector<8x128xf32>
    %201 = arith.addf %199, %200 : vector<8x128xf32>
    %202 = math.tanh %201 : vector<8x128xf32>
    %203 = arith.mulf %11, %202 : vector<8x128xf32>
    %204 = arith.addf %16, %203 : vector<8x128xf32>
    %205 = vector.extract_strided_slice %204 {offsets = [0, 0], sizes = [8, 32], strides = [1, 1]} : vector<8x128xf32> to vector<8x32xf32>
    %206 = vector.extract_strided_slice %204 {offsets = [0, 32], sizes = [8, 32], strides = [1, 1]} : vector<8x128xf32> to vector<8x32xf32>
    %207 = vector.extract_strided_slice %204 {offsets = [0, 64], sizes = [8, 32], strides = [1, 1]} : vector<8x128xf32> to vector<8x32xf32>
    %208 = vector.extract_strided_slice %204 {offsets = [0, 96], sizes = [8, 32], strides = [1, 1]} : vector<8x128xf32> to vector<8x32xf32>
    %209 = arith.mulf %206, %197 : vector<8x32xf32>
    %210 = arith.mulf %205, %207 : vector<8x32xf32>
    %211 = arith.addf %209, %210 : vector<8x32xf32>
    %212 = math.tanh %211 : vector<8x32xf32>
    %213 = arith.mulf %208, %212 : vector<8x32xf32>
    %c7_i32 = arith.constant 7 : i32
    %214 = vector.broadcast %c7_i32 : i32 to vector<8x1xi32>
    %215 = arith.cmpi sgt, %0, %214 : vector<8x1xi32>
    %216 = vector.shape_cast %215 : vector<8x1xi1> to vector<8x1xi1>
    %217 = vector.broadcast %216 : vector<8x1xi1> to vector<8x32xi1>
    %218 = arith.select %217, %213, %194 : vector<8x32xi1>, vector<8x32xf32>
    %c56_48 = arith.constant 56 : index
    %c0_49 = arith.constant 0 : index
    %219 = vector.load %arg12[%c56_48, %c0_49] : memref<64x32xf32, #tpu.memory_space<vmem>>, vector<8x32xf32>
    tpu.vector_store %arg12[%c56_48, %c0_49], %218 {strides = array<i32>} : memref<64x32xf32, #tpu.memory_space<vmem>>, vector<8x32xf32>,
    %c0_50 = arith.constant 0 : index
    %c0_51 = arith.constant 0 : index
    %220 = vector.load %arg12[%c0_50, %c0_51] : memref<64x32xf32, #tpu.memory_space<vmem>>, vector<64x32xf32>
    %c0_52 = arith.constant 0 : index
    %c0_53 = arith.constant 0 : index
    %221 = vector.load %arg5[%c0_52, %c0_53] : memref<32x128xf32, #tpu.memory_space<vmem>>, vector<32x128xf32>
    %cst_54 = arith.constant dense<0.000000e+00> : vector<64x128xf32>
    %222 = tpu.matmul %220, %221, %cst_54 {dimension_numbers = #tpu.dot_dimension_numbers<[1], [0], [0], [1], [0, 0, 1, 1], [], []>} : vector<64x32xf32>, vector<32x128xf32>, vector<64x128xf32> -> vector<64x128xf32>
    %c0_55 = arith.constant 0 : index
    %c0_56 = arith.constant 0 : index
    %223 = vector.load %arg7[%c0_55, %c0_56] : memref<1x128xf32, #tpu.memory_space<vmem>>, vector<1x128xf32>
    %224 = vector.broadcast %223 : vector<1x128xf32> to vector<64x128xf32>
    %225 = arith.addf %222, %224 : vector<64x128xf32>
    %226 = vector.broadcast %9 : vector<1x128xf32> to vector<64x128xf32>
    %227 = arith.mulf %225, %226 : vector<64x128xf32>
    %c0_57 = arith.constant 0 : index
    %c0_58 = arith.constant 0 : index
    %228 = vector.load %arg11[%c0_57, %c0_58] : memref<64x128xf32, #tpu.memory_space<vmem>>, vector<64x128xf32>
    tpu.vector_store %arg11[%c0_57, %c0_58], %227 {strides = array<i32>} : memref<64x128xf32, #tpu.memory_space<vmem>>, vector<64x128xf32>,
    %c0_59 = arith.constant 0 : index
    %c0_60 = arith.constant 0 : index
    %229 = vector.load %arg6[%c0_59, %c0_60] : memref<32x128xf32, #tpu.memory_space<vmem>>, vector<32x128xf32>
    %230 = vector.broadcast %9 : vector<1x128xf32> to vector<32x128xf32>
    %231 = arith.mulf %229, %230 : vector<32x128xf32>
    %cst_61 = arith.constant 0.000000e+00 : f32
    %232 = vector.broadcast %cst_61 : f32 to vector<8x32xf32>
    %cst_62 = arith.constant 0.000000e+00 : f32
    %233 = vector.broadcast %cst_62 : f32 to vector<8x32xf32>
    %c0_63 = arith.constant 0 : index
    %c0_64 = arith.constant 0 : index
    %234 = vector.load %arg11[%c0_63, %c0_64] : memref<64x128xf32, #tpu.memory_space<vmem>>, vector<8x128xf32>
    %cst_65 = arith.constant dense<0.000000e+00> : vector<8x128xf32>
    %235 = tpu.matmul %232, %231, %cst_65 {dimension_numbers = #tpu.dot_dimension_numbers<[1], [0], [0], [1], [0, 0, 1, 1], [], []>} : vector<8x32xf32>, vector<32x128xf32>, vector<8x128xf32> -> vector<8x128xf32>
    %236 = arith.addf %234, %235 : vector<8x128xf32>
    %237 = math.tanh %236 : vector<8x128xf32>
    %238 = arith.mulf %11, %237 : vector<8x128xf32>
    %239 = arith.addf %16, %238 : vector<8x128xf32>
    %240 = vector.extract_strided_slice %239 {offsets = [0, 0], sizes = [8, 32], strides = [1, 1]} : vector<8x128xf32> to vector<8x32xf32>
    %241 = vector.extract_strided_slice %239 {offsets = [0, 32], sizes = [8, 32], strides = [1, 1]} : vector<8x128xf32> to vector<8x32xf32>
    %242 = vector.extract_strided_slice %239 {offsets = [0, 64], sizes = [8, 32], strides = [1, 1]} : vector<8x128xf32> to vector<8x32xf32>
    %243 = vector.extract_strided_slice %239 {offsets = [0, 96], sizes = [8, 32], strides = [1, 1]} : vector<8x128xf32> to vector<8x32xf32>
    %244 = arith.mulf %241, %233 : vector<8x32xf32>
    %245 = arith.mulf %240, %242 : vector<8x32xf32>
    %246 = arith.addf %244, %245 : vector<8x32xf32>
    %247 = math.tanh %246 : vector<8x32xf32>
    %248 = arith.mulf %243, %247 : vector<8x32xf32>
    %c0_i32_66 = arith.constant 0 : i32
    %249 = vector.broadcast %c0_i32_66 : i32 to vector<8x1xi32>
    %250 = arith.cmpi sgt, %0, %249 : vector<8x1xi32>
    %251 = vector.shape_cast %250 : vector<8x1xi1> to vector<8x1xi1>
    %252 = vector.broadcast %251 : vector<8x1xi1> to vector<8x32xi1>
    %253 = arith.select %252, %248, %232 : vector<8x32xi1>, vector<8x32xf32>
    %254 = vector.shape_cast %250 : vector<8x1xi1> to vector<8x1xi1>
    %255 = vector.broadcast %254 : vector<8x1xi1> to vector<8x32xi1>
    %256 = arith.select %255, %246, %233 : vector<8x32xi1>, vector<8x32xf32>
    %c8_67 = arith.constant 8 : index
    %c0_68 = arith.constant 0 : index
    %257 = vector.load %arg11[%c8_67, %c0_68] : memref<64x128xf32, #tpu.memory_space<vmem>>, vector<8x128xf32>
    %cst_69 = arith.constant dense<0.000000e+00> : vector<8x128xf32>
    %258 = tpu.matmul %253, %231, %cst_69 {dimension_numbers = #tpu.dot_dimension_numbers<[1], [0], [0], [1], [0, 0, 1, 1], [], []>} : vector<8x32xf32>, vector<32x128xf32>, vector<8x128xf32> -> vector<8x128xf32>
    %259 = arith.addf %257, %258 : vector<8x128xf32>
    %260 = math.tanh %259 : vector<8x128xf32>
    %261 = arith.mulf %11, %260 : vector<8x128xf32>
    %262 = arith.addf %16, %261 : vector<8x128xf32>
    %263 = vector.extract_strided_slice %262 {offsets = [0, 0], sizes = [8, 32], strides = [1, 1]} : vector<8x128xf32> to vector<8x32xf32>
    %264 = vector.extract_strided_slice %262 {offsets = [0, 32], sizes = [8, 32], strides = [1, 1]} : vector<8x128xf32> to vector<8x32xf32>
    %265 = vector.extract_strided_slice %262 {offsets = [0, 64], sizes = [8, 32], strides = [1, 1]} : vector<8x128xf32> to vector<8x32xf32>
    %266 = vector.extract_strided_slice %262 {offsets = [0, 96], sizes = [8, 32], strides = [1, 1]} : vector<8x128xf32> to vector<8x32xf32>
    %267 = arith.mulf %264, %256 : vector<8x32xf32>
    %268 = arith.mulf %263, %265 : vector<8x32xf32>
    %269 = arith.addf %267, %268 : vector<8x32xf32>
    %270 = math.tanh %269 : vector<8x32xf32>
    %271 = arith.mulf %266, %270 : vector<8x32xf32>
    %c1_i32_70 = arith.constant 1 : i32
    %272 = vector.broadcast %c1_i32_70 : i32 to vector<8x1xi32>
    %273 = arith.cmpi sgt, %0, %272 : vector<8x1xi32>
    %274 = vector.shape_cast %273 : vector<8x1xi1> to vector<8x1xi1>
    %275 = vector.broadcast %274 : vector<8x1xi1> to vector<8x32xi1>
    %276 = arith.select %275, %271, %253 : vector<8x32xi1>, vector<8x32xf32>
    %277 = vector.shape_cast %273 : vector<8x1xi1> to vector<8x1xi1>
    %278 = vector.broadcast %277 : vector<8x1xi1> to vector<8x32xi1>
    %279 = arith.select %278, %269, %256 : vector<8x32xi1>, vector<8x32xf32>
    %c16_71 = arith.constant 16 : index
    %c0_72 = arith.constant 0 : index
    %280 = vector.load %arg11[%c16_71, %c0_72] : memref<64x128xf32, #tpu.memory_space<vmem>>, vector<8x128xf32>
    %cst_73 = arith.constant dense<0.000000e+00> : vector<8x128xf32>
    %281 = tpu.matmul %276, %231, %cst_73 {dimension_numbers = #tpu.dot_dimension_numbers<[1], [0], [0], [1], [0, 0, 1, 1], [], []>} : vector<8x32xf32>, vector<32x128xf32>, vector<8x128xf32> -> vector<8x128xf32>
    %282 = arith.addf %280, %281 : vector<8x128xf32>
    %283 = math.tanh %282 : vector<8x128xf32>
    %284 = arith.mulf %11, %283 : vector<8x128xf32>
    %285 = arith.addf %16, %284 : vector<8x128xf32>
    %286 = vector.extract_strided_slice %285 {offsets = [0, 0], sizes = [8, 32], strides = [1, 1]} : vector<8x128xf32> to vector<8x32xf32>
    %287 = vector.extract_strided_slice %285 {offsets = [0, 32], sizes = [8, 32], strides = [1, 1]} : vector<8x128xf32> to vector<8x32xf32>
    %288 = vector.extract_strided_slice %285 {offsets = [0, 64], sizes = [8, 32], strides = [1, 1]} : vector<8x128xf32> to vector<8x32xf32>
    %289 = vector.extract_strided_slice %285 {offsets = [0, 96], sizes = [8, 32], strides = [1, 1]} : vector<8x128xf32> to vector<8x32xf32>
    %290 = arith.mulf %287, %279 : vector<8x32xf32>
    %291 = arith.mulf %286, %288 : vector<8x32xf32>
    %292 = arith.addf %290, %291 : vector<8x32xf32>
    %293 = math.tanh %292 : vector<8x32xf32>
    %294 = arith.mulf %289, %293 : vector<8x32xf32>
    %c2_i32_74 = arith.constant 2 : i32
    %295 = vector.broadcast %c2_i32_74 : i32 to vector<8x1xi32>
    %296 = arith.cmpi sgt, %0, %295 : vector<8x1xi32>
    %297 = vector.shape_cast %296 : vector<8x1xi1> to vector<8x1xi1>
    %298 = vector.broadcast %297 : vector<8x1xi1> to vector<8x32xi1>
    %299 = arith.select %298, %294, %276 : vector<8x32xi1>, vector<8x32xf32>
    %300 = vector.shape_cast %296 : vector<8x1xi1> to vector<8x1xi1>
    %301 = vector.broadcast %300 : vector<8x1xi1> to vector<8x32xi1>
    %302 = arith.select %301, %292, %279 : vector<8x32xi1>, vector<8x32xf32>
    %c24_75 = arith.constant 24 : index
    %c0_76 = arith.constant 0 : index
    %303 = vector.load %arg11[%c24_75, %c0_76] : memref<64x128xf32, #tpu.memory_space<vmem>>, vector<8x128xf32>
    %cst_77 = arith.constant dense<0.000000e+00> : vector<8x128xf32>
    %304 = tpu.matmul %299, %231, %cst_77 {dimension_numbers = #tpu.dot_dimension_numbers<[1], [0], [0], [1], [0, 0, 1, 1], [], []>} : vector<8x32xf32>, vector<32x128xf32>, vector<8x128xf32> -> vector<8x128xf32>
    %305 = arith.addf %303, %304 : vector<8x128xf32>
    %306 = math.tanh %305 : vector<8x128xf32>
    %307 = arith.mulf %11, %306 : vector<8x128xf32>
    %308 = arith.addf %16, %307 : vector<8x128xf32>
    %309 = vector.extract_strided_slice %308 {offsets = [0, 0], sizes = [8, 32], strides = [1, 1]} : vector<8x128xf32> to vector<8x32xf32>
    %310 = vector.extract_strided_slice %308 {offsets = [0, 32], sizes = [8, 32], strides = [1, 1]} : vector<8x128xf32> to vector<8x32xf32>
    %311 = vector.extract_strided_slice %308 {offsets = [0, 64], sizes = [8, 32], strides = [1, 1]} : vector<8x128xf32> to vector<8x32xf32>
    %312 = vector.extract_strided_slice %308 {offsets = [0, 96], sizes = [8, 32], strides = [1, 1]} : vector<8x128xf32> to vector<8x32xf32>
    %313 = arith.mulf %310, %302 : vector<8x32xf32>
    %314 = arith.mulf %309, %311 : vector<8x32xf32>
    %315 = arith.addf %313, %314 : vector<8x32xf32>
    %316 = math.tanh %315 : vector<8x32xf32>
    %317 = arith.mulf %312, %316 : vector<8x32xf32>
    %c3_i32_78 = arith.constant 3 : i32
    %318 = vector.broadcast %c3_i32_78 : i32 to vector<8x1xi32>
    %319 = arith.cmpi sgt, %0, %318 : vector<8x1xi32>
    %320 = vector.shape_cast %319 : vector<8x1xi1> to vector<8x1xi1>
    %321 = vector.broadcast %320 : vector<8x1xi1> to vector<8x32xi1>
    %322 = arith.select %321, %317, %299 : vector<8x32xi1>, vector<8x32xf32>
    %323 = vector.shape_cast %319 : vector<8x1xi1> to vector<8x1xi1>
    %324 = vector.broadcast %323 : vector<8x1xi1> to vector<8x32xi1>
    %325 = arith.select %324, %315, %302 : vector<8x32xi1>, vector<8x32xf32>
    %c32_79 = arith.constant 32 : index
    %c0_80 = arith.constant 0 : index
    %326 = vector.load %arg11[%c32_79, %c0_80] : memref<64x128xf32, #tpu.memory_space<vmem>>, vector<8x128xf32>
    %cst_81 = arith.constant dense<0.000000e+00> : vector<8x128xf32>
    %327 = tpu.matmul %322, %231, %cst_81 {dimension_numbers = #tpu.dot_dimension_numbers<[1], [0], [0], [1], [0, 0, 1, 1], [], []>} : vector<8x32xf32>, vector<32x128xf32>, vector<8x128xf32> -> vector<8x128xf32>
    %328 = arith.addf %326, %327 : vector<8x128xf32>
    %329 = math.tanh %328 : vector<8x128xf32>
    %330 = arith.mulf %11, %329 : vector<8x128xf32>
    %331 = arith.addf %16, %330 : vector<8x128xf32>
    %332 = vector.extract_strided_slice %331 {offsets = [0, 0], sizes = [8, 32], strides = [1, 1]} : vector<8x128xf32> to vector<8x32xf32>
    %333 = vector.extract_strided_slice %331 {offsets = [0, 32], sizes = [8, 32], strides = [1, 1]} : vector<8x128xf32> to vector<8x32xf32>
    %334 = vector.extract_strided_slice %331 {offsets = [0, 64], sizes = [8, 32], strides = [1, 1]} : vector<8x128xf32> to vector<8x32xf32>
    %335 = vector.extract_strided_slice %331 {offsets = [0, 96], sizes = [8, 32], strides = [1, 1]} : vector<8x128xf32> to vector<8x32xf32>
    %336 = arith.mulf %333, %325 : vector<8x32xf32>
    %337 = arith.mulf %332, %334 : vector<8x32xf32>
    %338 = arith.addf %336, %337 : vector<8x32xf32>
    %339 = math.tanh %338 : vector<8x32xf32>
    %340 = arith.mulf %335, %339 : vector<8x32xf32>
    %c4_i32_82 = arith.constant 4 : i32
    %341 = vector.broadcast %c4_i32_82 : i32 to vector<8x1xi32>
    %342 = arith.cmpi sgt, %0, %341 : vector<8x1xi32>
    %343 = vector.shape_cast %342 : vector<8x1xi1> to vector<8x1xi1>
    %344 = vector.broadcast %343 : vector<8x1xi1> to vector<8x32xi1>
    %345 = arith.select %344, %340, %322 : vector<8x32xi1>, vector<8x32xf32>
    %346 = vector.shape_cast %342 : vector<8x1xi1> to vector<8x1xi1>
    %347 = vector.broadcast %346 : vector<8x1xi1> to vector<8x32xi1>
    %348 = arith.select %347, %338, %325 : vector<8x32xi1>, vector<8x32xf32>
    %c40_83 = arith.constant 40 : index
    %c0_84 = arith.constant 0 : index
    %349 = vector.load %arg11[%c40_83, %c0_84] : memref<64x128xf32, #tpu.memory_space<vmem>>, vector<8x128xf32>
    %cst_85 = arith.constant dense<0.000000e+00> : vector<8x128xf32>
    %350 = tpu.matmul %345, %231, %cst_85 {dimension_numbers = #tpu.dot_dimension_numbers<[1], [0], [0], [1], [0, 0, 1, 1], [], []>} : vector<8x32xf32>, vector<32x128xf32>, vector<8x128xf32> -> vector<8x128xf32>
    %351 = arith.addf %349, %350 : vector<8x128xf32>
    %352 = math.tanh %351 : vector<8x128xf32>
    %353 = arith.mulf %11, %352 : vector<8x128xf32>
    %354 = arith.addf %16, %353 : vector<8x128xf32>
    %355 = vector.extract_strided_slice %354 {offsets = [0, 0], sizes = [8, 32], strides = [1, 1]} : vector<8x128xf32> to vector<8x32xf32>
    %356 = vector.extract_strided_slice %354 {offsets = [0, 32], sizes = [8, 32], strides = [1, 1]} : vector<8x128xf32> to vector<8x32xf32>
    %357 = vector.extract_strided_slice %354 {offsets = [0, 64], sizes = [8, 32], strides = [1, 1]} : vector<8x128xf32> to vector<8x32xf32>
    %358 = vector.extract_strided_slice %354 {offsets = [0, 96], sizes = [8, 32], strides = [1, 1]} : vector<8x128xf32> to vector<8x32xf32>
    %359 = arith.mulf %356, %348 : vector<8x32xf32>
    %360 = arith.mulf %355, %357 : vector<8x32xf32>
    %361 = arith.addf %359, %360 : vector<8x32xf32>
    %362 = math.tanh %361 : vector<8x32xf32>
    %363 = arith.mulf %358, %362 : vector<8x32xf32>
    %c5_i32_86 = arith.constant 5 : i32
    %364 = vector.broadcast %c5_i32_86 : i32 to vector<8x1xi32>
    %365 = arith.cmpi sgt, %0, %364 : vector<8x1xi32>
    %366 = vector.shape_cast %365 : vector<8x1xi1> to vector<8x1xi1>
    %367 = vector.broadcast %366 : vector<8x1xi1> to vector<8x32xi1>
    %368 = arith.select %367, %363, %345 : vector<8x32xi1>, vector<8x32xf32>
    %369 = vector.shape_cast %365 : vector<8x1xi1> to vector<8x1xi1>
    %370 = vector.broadcast %369 : vector<8x1xi1> to vector<8x32xi1>
    %371 = arith.select %370, %361, %348 : vector<8x32xi1>, vector<8x32xf32>
    %c48_87 = arith.constant 48 : index
    %c0_88 = arith.constant 0 : index
    %372 = vector.load %arg11[%c48_87, %c0_88] : memref<64x128xf32, #tpu.memory_space<vmem>>, vector<8x128xf32>
    %cst_89 = arith.constant dense<0.000000e+00> : vector<8x128xf32>
    %373 = tpu.matmul %368, %231, %cst_89 {dimension_numbers = #tpu.dot_dimension_numbers<[1], [0], [0], [1], [0, 0, 1, 1], [], []>} : vector<8x32xf32>, vector<32x128xf32>, vector<8x128xf32> -> vector<8x128xf32>
    %374 = arith.addf %372, %373 : vector<8x128xf32>
    %375 = math.tanh %374 : vector<8x128xf32>
    %376 = arith.mulf %11, %375 : vector<8x128xf32>
    %377 = arith.addf %16, %376 : vector<8x128xf32>
    %378 = vector.extract_strided_slice %377 {offsets = [0, 0], sizes = [8, 32], strides = [1, 1]} : vector<8x128xf32> to vector<8x32xf32>
    %379 = vector.extract_strided_slice %377 {offsets = [0, 32], sizes = [8, 32], strides = [1, 1]} : vector<8x128xf32> to vector<8x32xf32>
    %380 = vector.extract_strided_slice %377 {offsets = [0, 64], sizes = [8, 32], strides = [1, 1]} : vector<8x128xf32> to vector<8x32xf32>
    %381 = vector.extract_strided_slice %377 {offsets = [0, 96], sizes = [8, 32], strides = [1, 1]} : vector<8x128xf32> to vector<8x32xf32>
    %382 = arith.mulf %379, %371 : vector<8x32xf32>
    %383 = arith.mulf %378, %380 : vector<8x32xf32>
    %384 = arith.addf %382, %383 : vector<8x32xf32>
    %385 = math.tanh %384 : vector<8x32xf32>
    %386 = arith.mulf %381, %385 : vector<8x32xf32>
    %c6_i32_90 = arith.constant 6 : i32
    %387 = vector.broadcast %c6_i32_90 : i32 to vector<8x1xi32>
    %388 = arith.cmpi sgt, %0, %387 : vector<8x1xi32>
    %389 = vector.shape_cast %388 : vector<8x1xi1> to vector<8x1xi1>
    %390 = vector.broadcast %389 : vector<8x1xi1> to vector<8x32xi1>
    %391 = arith.select %390, %386, %368 : vector<8x32xi1>, vector<8x32xf32>
    %392 = vector.shape_cast %388 : vector<8x1xi1> to vector<8x1xi1>
    %393 = vector.broadcast %392 : vector<8x1xi1> to vector<8x32xi1>
    %394 = arith.select %393, %384, %371 : vector<8x32xi1>, vector<8x32xf32>
    %c56_91 = arith.constant 56 : index
    %c0_92 = arith.constant 0 : index
    %395 = vector.load %arg11[%c56_91, %c0_92] : memref<64x128xf32, #tpu.memory_space<vmem>>, vector<8x128xf32>
    %cst_93 = arith.constant dense<0.000000e+00> : vector<8x128xf32>
    %396 = tpu.matmul %391, %231, %cst_93 {dimension_numbers = #tpu.dot_dimension_numbers<[1], [0], [0], [1], [0, 0, 1, 1], [], []>} : vector<8x32xf32>, vector<32x128xf32>, vector<8x128xf32> -> vector<8x128xf32>
    %397 = arith.addf %395, %396 : vector<8x128xf32>
    %398 = math.tanh %397 : vector<8x128xf32>
    %399 = arith.mulf %11, %398 : vector<8x128xf32>
    %400 = arith.addf %16, %399 : vector<8x128xf32>
    %401 = vector.extract_strided_slice %400 {offsets = [0, 0], sizes = [8, 32], strides = [1, 1]} : vector<8x128xf32> to vector<8x32xf32>
    %402 = vector.extract_strided_slice %400 {offsets = [0, 32], sizes = [8, 32], strides = [1, 1]} : vector<8x128xf32> to vector<8x32xf32>
    %403 = vector.extract_strided_slice %400 {offsets = [0, 64], sizes = [8, 32], strides = [1, 1]} : vector<8x128xf32> to vector<8x32xf32>
    %404 = vector.extract_strided_slice %400 {offsets = [0, 96], sizes = [8, 32], strides = [1, 1]} : vector<8x128xf32> to vector<8x32xf32>
    %405 = arith.mulf %402, %394 : vector<8x32xf32>
    %406 = arith.mulf %401, %403 : vector<8x32xf32>
    %407 = arith.addf %405, %406 : vector<8x32xf32>
    %408 = math.tanh %407 : vector<8x32xf32>
    %409 = arith.mulf %404, %408 : vector<8x32xf32>
    %c7_i32_94 = arith.constant 7 : i32
    %410 = vector.broadcast %c7_i32_94 : i32 to vector<8x1xi32>
    %411 = arith.cmpi sgt, %0, %410 : vector<8x1xi32>
    %412 = vector.shape_cast %411 : vector<8x1xi1> to vector<8x1xi1>
    %413 = vector.broadcast %412 : vector<8x1xi1> to vector<8x32xi1>
    %414 = arith.select %413, %409, %391 : vector<8x32xi1>, vector<8x32xf32>
    %c0_95 = arith.constant 0 : index
    %c0_96 = arith.constant 0 : index
    %415 = vector.load %arg8[%c0_95, %c0_96] : memref<32x2xf32, #tpu.memory_space<vmem>>, vector<32x2xf32>
    %cst_97 = arith.constant dense<0.000000e+00> : vector<8x2xf32>
    %416 = tpu.matmul %414, %415, %cst_97 {dimension_numbers = #tpu.dot_dimension_numbers<[1], [0], [0], [1], [0, 0, 1, 1], [], []>} : vector<8x32xf32>, vector<32x2xf32>, vector<8x2xf32> -> vector<8x2xf32>
    %c0_98 = arith.constant 0 : index
    %c0_99 = arith.constant 0 : index
    %417 = vector.load %arg9[%c0_98, %c0_99] : memref<1x2xf32, #tpu.memory_space<vmem>>, vector<1x2xf32>
    %418 = vector.broadcast %417 : vector<1x2xf32> to vector<8x2xf32>
    %419 = arith.addf %416, %418 : vector<8x2xf32>
    %c0_100 = arith.constant 0 : index
    %c0_101 = arith.constant 0 : index
    %420 = vector.load %arg10[%c0_100, %c0_101] : memref<8x2xf32, #tpu.memory_space<vmem>>, vector<8x2xf32>
    tpu.vector_store %arg10[%c0_100, %c0_101], %419 {strides = array<i32>} : memref<8x2xf32, #tpu.memory_space<vmem>>, vector<8x2xf32>,
    return
  }
}

</mosaic_0001>

<llo_original>
// kernel: lstm_model_forward.1
$region0: #{lstm_model_forward.1}
  #allocation0 [shape = 'u32[]', space=smem, size = 0x4, offset = 0x4, fixed_abs, tag = 'smem constant byte address 0x4 - core index']
  #allocation1 [shape = 'u32[144,128]{1,0:T(1,128)}', space=vmem, size = 0x12000, scoped, tag = 'internal scratch']
  #allocation2 [shape = 'f32[64,128]{1,0:T(8,128)}', space=vmem, size = 0x8000, scoped, tag = 'scratch operand']
  #allocation3 [shape = 'f32[64,32]{1,0:T(8,128)}', space=vmem, size = 0x8000, scoped, tag = 'scratch operand']
  %s0 = inlined_call_operand.vmem [shape: f32[64,32], index: 0, kind: input, shape index: {}]
  %s1 = inlined_call_operand.vmem [shape: s32[8,1], index: 1, kind: input, shape index: {}]
  %s2 = inlined_call_operand.vmem [shape: f32[32,128], index: 2, kind: input, shape index: {}]
  %s3 = inlined_call_operand.vmem [shape: f32[32,128], index: 3, kind: input, shape index: {}]
  %s4 = inlined_call_operand.vmem [shape: f32[1,128], index: 4, kind: input, shape index: {}]
  %s5 = inlined_call_operand.vmem [shape: f32[32,128], index: 5, kind: input, shape index: {}]
  %s6 = inlined_call_operand.vmem [shape: f32[32,128], index: 6, kind: input, shape index: {}]
  %s7 = inlined_call_operand.vmem [shape: f32[1,128], index: 7, kind: input, shape index: {}]
  %s8 = inlined_call_operand.vmem [shape: f32[32,2], index: 8, kind: input, shape index: {}]
  %s9 = inlined_call_operand.vmem [shape: f32[1,2], index: 9, kind: input, shape index: {}]
  %s10 = inlined_call_operand.vmem [shape: f32[8,2], index: 10, kind: output, shape index: {}]
  %s11 = sld [smem:[#allocation0]]
  $region50: #{lstm_model_forward.1} parent=0
    _
  %s13 = ssub.s32 1, %s11
  %s14 = scalar_select 0, %s13, %s11
  // Predicated region
  $region2: #{lstm_model_forward.1} parent=0 // pred_check
    _
  $region3: #{lstm_model_forward.1} parent=0 // pred_check_branch
    %16 = sbr.rel (0) target = $region5
  $region4: #{lstm_model_forward.1} parent=0 // pred_region
    _
  $region5: #{lstm_model_forward.1} parent=0 // pred_fallthru
    _
  // Predicated region
  $region6: #{lstm_model_forward.1} parent=0 // pred_check
    _
  $region7: #{lstm_model_forward.1} parent=0 // pred_check_branch
    %18 = sbr.rel (0) target = $region9
  $region8: #{lstm_model_forward.1} parent=0 // pred_region
    _
  $region9: #{lstm_model_forward.1} parent=0 // pred_fallthru
    _
  // Predicated region
  $region10: #{lstm_model_forward.1} parent=0 // pred_check
    _
  $region11: #{lstm_model_forward.1} parent=0 // pred_check_branch
    %20 = sbr.rel (0) target = $region13
  $region12: #{lstm_model_forward.1} parent=0 // pred_region
    _
  $region13: #{lstm_model_forward.1} parent=0 // pred_fallthru
    _
  // Predicated region
  $region14: #{lstm_model_forward.1} parent=0 // pred_check
    _
  $region15: #{lstm_model_forward.1} parent=0 // pred_check_branch
    %22 = sbr.rel (0) target = $region17
  $region16: #{lstm_model_forward.1} parent=0 // pred_region
    _
  $region17: #{lstm_model_forward.1} parent=0 // pred_fallthru
    _
  // Predicated region
  $region18: #{lstm_model_forward.1} parent=0 // pred_check
    _
  $region19: #{lstm_model_forward.1} parent=0 // pred_check_branch
    %24 = sbr.rel (0) target = $region21
  $region20: #{lstm_model_forward.1} parent=0 // pred_region
    _
  $region21: #{lstm_model_forward.1} parent=0 // pred_fallthru
    _
  // Predicated region
  $region22: #{lstm_model_forward.1} parent=0 // pred_check
    _
  $region23: #{lstm_model_forward.1} parent=0 // pred_check_branch
    %26 = sbr.rel (0) target = $region25
  $region24: #{lstm_model_forward.1} parent=0 // pred_region
    _
  $region25: #{lstm_model_forward.1} parent=0 // pred_fallthru
    _
  // Predicated region
  $region26: #{lstm_model_forward.1} parent=0 // pred_check
    _
  $region27: #{lstm_model_forward.1} parent=0 // pred_check_branch
    %28 = sbr.rel (0) target = $region29
  $region28: #{lstm_model_forward.1} parent=0 // pred_region
    _
  $region29: #{lstm_model_forward.1} parent=0 // pred_fallthru
    _
  // Predicated region
  $region30: #{lstm_model_forward.1} parent=0 // pred_check
    _
  $region31: #{lstm_model_forward.1} parent=0 // pred_check_branch
    %30 = sbr.rel (0) target = $region33
  $region32: #{lstm_model_forward.1} parent=0 // pred_region
    _
  $region33: #{lstm_model_forward.1} parent=0 // pred_fallthru
    _
  // Predicated region
  $region34: #{lstm_model_forward.1} parent=0 // pred_check
    _
  $region35: #{lstm_model_forward.1} parent=0 // pred_check_branch
    %32 = sbr.rel (0) target = $region37
  $region36: #{lstm_model_forward.1} parent=0 // pred_region
    _
  $region37: #{lstm_model_forward.1} parent=0 // pred_fallthru
    _
  // Predicated region
  $region38: #{lstm_model_forward.1} parent=0 // pred_check
    _
  $region39: #{lstm_model_forward.1} parent=0 // pred_check_branch
    %34 = sbr.rel (0) target = $region41
  $region40: #{lstm_model_forward.1} parent=0 // pred_region
    _
  $region41: #{lstm_model_forward.1} parent=0 // pred_fallthru
    _
  %v35 = vld [vmem:[%s1] sm:$0xff]
  %v36 = vlaneseq
  %v37 = vand.u32 %v36, 127
  %vm38 = vcmp.ge.s32.totalorder %v37, 64
  %vm39 = vcmp.lt.s32.totalorder %v37, 96
  %vm40 = vmand %vm38, %vm39
  %v41 = vsel %vm40, 1.0, 0.5
  %v42 = vsel %vm40, 0.0, 0.5
  %v43 = vld [vmem:[%s0] sm:$0xff]
  %v44 = vld [vmem:[%s0 + $0x8] sm:$0xff]
  %v45 = vld [vmem:[%s0 + $0x10] sm:$0xff]
  %v46 = vld [vmem:[%s0 + $0x18] sm:$0xff]
  %v47 = vld [vmem:[%s0 + $0x20] sm:$0xff]
  %v48 = vld [vmem:[%s0 + $0x28] sm:$0xff]
  %v49 = vld [vmem:[%s0 + $0x30] sm:$0xff]
  %v50 = vld [vmem:[%s0 + $0x38] sm:$0xff]
  %v51 = vld [vmem:[%s2] sm:$0xff]
  %v52 = vld [vmem:[%s2 + $0x8] sm:$0xff]
  %v53 = vld [vmem:[%s2 + $0x10] sm:$0xff]
  %v54 = vld [vmem:[%s2 + $0x18] sm:$0xff]
  %v55 = vld [vmem:[%s4] sm:$0x1]
  %v57 = vlaneseq
  %v58 = vshrl.u32 %v57, 7
  %v59 = vsub.s32 0, %v58
  %v60 = vrot.slane %v55, %v59
  %vm62 = vcmask 261120
  %v64 = vsel %vm62, %v43, 0
  %v67 = vsel %vm62, %v44, 0
  %v70 = vsel %vm62, %v45, 0
  %v73 = vsel %vm62, %v46, 0
  %v76 = vsel %vm62, %v47, 0
  %v79 = vsel %vm62, %v48, 0
  %v82 = vsel %vm62, %v49, 0
  %v85 = vsel %vm62, %v50, 0
  %87 = vmatprep.subr.mxu0 0.0
  %88 = vmatpush1.msra.mxu0 0.0
  %89 = vmatprep.subr.mxu0 0.0
  %90 = vmatpush1.msra.mxu0 0.0
  %91 = vmatprep.subr.mxu0 0.0
  %92 = vmatpush1.msra.mxu0 0.0
  %93 = vmatprep.subr.mxu0 0.0
  %94 = vmatpush1.msra.mxu0 0.0
  %95 = vmatprep.subr.mxu0 0.0
  %96 = vmatpush1.msra.mxu0 0.0
  %97 = vmatprep.subr.mxu0 0.0
  %98 = vmatpush1.msra.mxu0 0.0
  %99 = vmatprep.subr.mxu0 0.0
  %100 = vmatpush1.msra.mxu0 0.0
  %101 = vmatprep.subr.mxu0 0.0
  %102 = vmatpush1.msra.mxu0 0.0
  %103 = vmatprep.subr.mxu0 0.0
  %104 = vmatpush1.msra.mxu0 0.0
  %105 = vmatprep.subr.mxu0 0.0
  %106 = vmatpush1.msra.mxu0 0.0
  %107 = vmatprep.subr.mxu0 0.0
  %108 = vmatpush1.msra.mxu0 0.0
  %109 = vmatprep.subr.mxu0 0.0
  %110 = vmatpush1.msra.mxu0 0.0
  %111 = vmatprep.subr.mxu0 0.0
  %112 = vmatpush1.msra.mxu0 %v54
  %113 = vmatprep.subr.mxu0 0.0
  %114 = vmatpush1.msra.mxu0 %v53
  %115 = vmatprep.subr.mxu0 0.0
  %116 = vmatpush1.msra.mxu0 %v52
  %117 = vmatprep.subr.mxu0 0.0
  %118 = vmatpush1.msra.mxu0 %v51
  %119 = vmatprep.subr.mxu0 0.0
  %120 = vmatpush2.msra.mxu0 0.0
  %121 = vmatprep.subr.mxu0 0.0
  %122 = vmatpush2.msra.mxu0 0.0
  %123 = vmatprep.subr.mxu0 0.0
  %124 = vmatpush2.msra.mxu0 0.0
  %125 = vmatprep.subr.mxu0 0.0
  %126 = vmatpush2.msra.mxu0 0.0
  %127 = vmatprep.subr.mxu0 0.0
  %128 = vmatpush2.msra.mxu0 0.0
  %129 = vmatprep.subr.mxu0 0.0
  %130 = vmatpush2.msra.mxu0 0.0
  %131 = vmatprep.subr.mxu0 0.0
  %132 = vmatpush2.msra.mxu0 0.0
  %133 = vmatprep.subr.mxu0 0.0
  %134 = vmatpush2.msra.mxu0 0.0
  %135 = vmatprep.subr.mxu0 0.0
  %136 = vmatpush2.msra.mxu0 0.0
  %137 = vmatprep.subr.mxu0 0.0
  %138 = vmatpush2.msra.mxu0 0.0
  %139 = vmatprep.subr.mxu0 0.0
  %140 = vmatpush2.msra.mxu0 0.0
  %141 = vmatprep.subr.mxu0 0.0
  %142 = vmatpush2.msra.mxu0 0.0
  %143 = vmatprep.subr.mxu0 0.0
  %144 = vmatpush2.msra.mxu0 0.0
  %145 = vmatprep.subr.mxu0 0.0
  %146 = vmatpush2.msra.mxu0 0.0
  %147 = vmatprep.subr.mxu0 0.0
  %148 = vmatpush2.msra.mxu0 0.0
  %149 = vmatprep.subr.mxu0 0.0
  %150 = vmatpush2.msra.mxu0 0.0
  %151 = vmatprep.mubr.f32.mxu0 0.0
  %152 = vmatmul.mubr.f32.gmra.mxu0 %v64
  %v153 = vpop.f32.mrf.mxu0
  %v154 = vadd.f32 %v60, %v153
  %v155 = vpop.f32.mrf.mxu0
  %156 = vmatprep.mubr.f32.mxu0 0.0
  %157 = vmatmul.mubr.f32.gmra.mxu0 %v67
  %v158 = vpop.f32.mrf.mxu0
  %v159 = vadd.f32 %v60, %v158
  %v160 = vpop.f32.mrf.mxu0
  %161 = vmatprep.mubr.f32.mxu0 0.0
  %162 = vmatmul.mubr.f32.gmra.mxu0 %v70
  %v163 = vpop.f32.mrf.mxu0
  %v164 = vadd.f32 %v60, %v163
  %v165 = vpop.f32.mrf.mxu0
  %166 = vmatprep.mubr.f32.mxu0 0.0
  %167 = vmatmul.mubr.f32.gmra.mxu0 %v73
  %v168 = vpop.f32.mrf.mxu0
  %v169 = vadd.f32 %v60, %v168
  %v170 = vpop.f32.mrf.mxu0
  %171 = vmatprep.mubr.f32.mxu0 0.0
  %172 = vmatmul.mubr.f32.gmra.mxu0 %v76
  %v173 = vpop.f32.mrf.mxu0
  %v174 = vadd.f32 %v60, %v173
  %v175 = vpop.f32.mrf.mxu0
  %176 = vmatprep.mubr.f32.mxu0 0.0
  %177 = vmatmul.mubr.f32.gmra.mxu0 %v79
  %v178 = vpop.f32.mrf.mxu0
  %v179 = vadd.f32 %v60, %v178
  %v180 = vpop.f32.mrf.mxu0
  %181 = vmatprep.mubr.f32.mxu0 0.0
  %182 = vmatmul.mubr.f32.gmra.mxu0 %v82
  %v183 = vpop.f32.mrf.mxu0
  %v184 = vadd.f32 %v60, %v183
  %v185 = vpop.f32.mrf.mxu0
  %186 = vmatprep.mubr.f32.mxu0 0.0
  %187 = vmatmul.mubr.f32.gmra.mxu0 %v85
  %v188 = vpop.f32.mrf.mxu0
  %v189 = vadd.f32 %v60, %v188
  %v190 = vpop.f32.mrf.mxu0
  %191 = vdwg.mxu0
  %v192 = vmul.f32 %v154, %v41
  %v193 = vmul.f32 %v159, %v41
  %v194 = vmul.f32 %v164, %v41
  %v195 = vmul.f32 %v169, %v41
  %v196 = vmul.f32 %v174, %v41
  %v197 = vmul.f32 %v179, %v41
  %v198 = vmul.f32 %v184, %v41
  %v199 = vmul.f32 %v189, %v41
  %200 = vst [vmem:[#allocation2] sm:$0xff] %v192
  %201 = vst [vmem:[#allocation2 + $0x8] sm:$0xff] %v193
  %202 = vst [vmem:[#allocation2 + $0x10] sm:$0xff] %v194
  %203 = vst [vmem:[#allocation2 + $0x18] sm:$0xff] %v195
  %204 = vst [vmem:[#allocation2 + $0x20] sm:$0xff] %v196
  %205 = vst [vmem:[#allocation2 + $0x28] sm:$0xff] %v197
  %206 = vst [vmem:[#allocation2 + $0x30] sm:$0xff] %v198
  %207 = vst [vmem:[#allocation2 + $0x38] sm:$0xff] %v199
  %v208 = vld [vmem:[%s3] sm:$0xff]
  %v209 = vld [vmem:[%s3 + $0x8] sm:$0xff]
  %v210 = vld [vmem:[%s3 + $0x10] sm:$0xff]
  %v211 = vld [vmem:[%s3 + $0x18] sm:$0xff]
  %v212 = vmul.f32 %v208, %v41
  %v213 = vmul.f32 %v209, %v41
  %v214 = vmul.f32 %v210, %v41
  %v215 = vmul.f32 %v211, %v41
  %v216 = vld [vmem:[#allocation2] sm:$0xff]
  %v218 = vsel %vm62, 0.0, 0
  %220 = vmatprep.subr.mxu0 0.0
  %221 = vmatpush1.msra.mxu0 0.0
  %222 = vmatprep.subr.mxu0 0.0
  %223 = vmatpush1.msra.mxu0 0.0
  %224 = vmatprep.subr.mxu0 0.0
  %225 = vmatpush1.msra.mxu0 0.0
  %226 = vmatprep.subr.mxu0 0.0
  %227 = vmatpush1.msra.mxu0 0.0
  %228 = vmatprep.subr.mxu0 0.0
  %229 = vmatpush1.msra.mxu0 0.0
  %230 = vmatprep.subr.mxu0 0.0
  %231 = vmatpush1.msra.mxu0 0.0
  %232 = vmatprep.subr.mxu0 0.0
  %233 = vmatpush1.msra.mxu0 0.0
  %234 = vmatprep.subr.mxu0 0.0
  %235 = vmatpush1.msra.mxu0 0.0
  %236 = vmatprep.subr.mxu0 0.0
  %237 = vmatpush1.msra.mxu0 0.0
  %238 = vmatprep.subr.mxu0 0.0
  %239 = vmatpush1.msra.mxu0 0.0
  %240 = vmatprep.subr.mxu0 0.0
  %241 = vmatpush1.msra.mxu0 0.0
  %242 = vmatprep.subr.mxu0 0.0
  %243 = vmatpush1.msra.mxu0 0.0
  %244 = vmatprep.subr.mxu0 0.0
  %245 = vmatpush1.msra.mxu0 %v215
  %246 = vmatprep.subr.mxu0 0.0
  %247 = vmatpush1.msra.mxu0 %v214
  %248 = vmatprep.subr.mxu0 0.0
  %249 = vmatpush1.msra.mxu0 %v213
  %250 = vmatprep.subr.mxu0 0.0
  %251 = vmatpush1.msra.mxu0 %v212
  %252 = vmatprep.subr.mxu0 0.0
  %253 = vmatpush2.msra.mxu0 0.0
  %254 = vmatprep.subr.mxu0 0.0
  %255 = vmatpush2.msra.mxu0 0.0
  %256 = vmatprep.subr.mxu0 0.0
  %257 = vmatpush2.msra.mxu0 0.0
  %258 = vmatprep.subr.mxu0 0.0
  %259 = vmatpush2.msra.mxu0 0.0
  %260 = vmatprep.subr.mxu0 0.0
  %261 = vmatpush2.msra.mxu0 0.0
  %262 = vmatprep.subr.mxu0 0.0
  %263 = vmatpush2.msra.mxu0 0.0
  %264 = vmatprep.subr.mxu0 0.0
  %265 = vmatpush2.msra.mxu0 0.0
  %266 = vmatprep.subr.mxu0 0.0
  %267 = vmatpush2.msra.mxu0 0.0
  %268 = vmatprep.subr.mxu0 0.0
  %269 = vmatpush2.msra.mxu0 0.0
  %270 = vmatprep.subr.mxu0 0.0
  %271 = vmatpush2.msra.mxu0 0.0
  %272 = vmatprep.subr.mxu0 0.0
  %273 = vmatpush2.msra.mxu0 0.0
  %274 = vmatprep.subr.mxu0 0.0
  %275 = vmatpush2.msra.mxu0 0.0
  %276 = vmatprep.subr.mxu0 0.0
  %277 = vmatpush2.msra.mxu0 0.0
  %278 = vmatprep.subr.mxu0 0.0
  %279 = vmatpush2.msra.mxu0 0.0
  %280 = vmatprep.subr.mxu0 0.0
  %281 = vmatpush2.msra.mxu0 0.0
  %282 = vmatprep.subr.mxu0 0.0
  %283 = vmatpush2.msra.mxu0 0.0
  %284 = vmatprep.mubr.f32.mxu0 0.0
  %285 = vmatmul.mubr.f32.gmra.mxu0 %v218
  %v286 = vpop.f32.mrf.mxu0
  %v287 = vadd.f32 0.0, %v286
  %v288 = vpop.f32.mrf.mxu0
  %289 = vdwg.mxu0
  %v290 = vadd.f32 %v216, %v287
  %v291 = vtanh.pop %v290
  %v292 = vmul.f32 %v41, %v291
  %v293 = vadd.f32 %v42, %v292
  %v294 = vmul.f32 %v293, 0.0
  %296 = vrot.lane.b32.xlu0 %v293, 64
  %v297 = vpop.permute.xlu0 %296
  %v299 = vmul.f32 %v293, %v297
  %301 = vrot.lane.b32.xlu0 %v299, 32
  %v302 = vpop.permute.xlu0 %301
  %v304 = vadd.f32 %v294, %v302
  %v305 = vtanh.pop %v304
  %307 = vrot.lane.b32.xlu0 %v305, 64
  %v308 = vpop.permute.xlu0 %307
  %v310 = vmul.f32 %v293, %v308
  %vm311 = vcmp.gt.s32.totalorder %v35, 0
  %v312 = vsel %vm311, 1, 0
  %313 = vset.pattern.permute.xlu0 0
  %314 = vperm.xlu0 %313, %v312
  %v315 = vpop.permute.xlu0 %314
  %vm316 = vcmp.eq.s32.totalorder %v315, 1
  %v317 = vsel %vm316, %v310, 0.0
  %v318 = vsel %vm316, %v304, 0.0
  %320 = vrot.lane.b32.xlu0 %v317, 32
  %v321 = vpop.permute.xlu0 %320
  %323 = vst.msk [vmem:[#allocation3] sm:$0xff] %vm62, %v321
  %v324 = vld [vmem:[#allocation2 + $0x8] sm:$0xff]
  %v325 = vsel %vm62, %v321, 0
  %327 = vmatprep.subr.mxu0 0.0
  %328 = vmatpush1.msra.mxu0 0.0
  %329 = vmatprep.subr.mxu0 0.0
  %330 = vmatpush1.msra.mxu0 0.0
  %331 = vmatprep.subr.mxu0 0.0
  %332 = vmatpush1.msra.mxu0 0.0
  %333 = vmatprep.subr.mxu0 0.0
  %334 = vmatpush1.msra.mxu0 0.0
  %335 = vmatprep.subr.mxu0 0.0
  %336 = vmatpush1.msra.mxu0 0.0
  %337 = vmatprep.subr.mxu0 0.0
  %338 = vmatpush1.msra.mxu0 0.0
  %339 = vmatprep.subr.mxu0 0.0
  %340 = vmatpush1.msra.mxu0 0.0
  %341 = vmatprep.subr.mxu0 0.0
  %342 = vmatpush1.msra.mxu0 0.0
  %343 = vmatprep.subr.mxu0 0.0
  %344 = vmatpush1.msra.mxu0 0.0
  %345 = vmatprep.subr.mxu0 0.0
  %346 = vmatpush1.msra.mxu0 0.0
  %347 = vmatprep.subr.mxu0 0.0
  %348 = vmatpush1.msra.mxu0 0.0
  %349 = vmatprep.subr.mxu0 0.0
  %350 = vmatpush1.msra.mxu0 0.0
  %351 = vmatprep.subr.mxu0 0.0
  %352 = vmatpush1.msra.mxu0 %v215
  %353 = vmatprep.subr.mxu0 0.0
  %354 = vmatpush1.msra.mxu0 %v214
  %355 = vmatprep.subr.mxu0 0.0
  %356 = vmatpush1.msra.mxu0 %v213
  %357 = vmatprep.subr.mxu0 0.0
  %358 = vmatpush1.msra.mxu0 %v212
  %359 = vmatprep.subr.mxu0 0.0
  %360 = vmatpush2.msra.mxu0 0.0
  %361 = vmatprep.subr.mxu0 0.0
  %362 = vmatpush2.msra.mxu0 0.0
  %363 = vmatprep.subr.mxu0 0.0
  %364 = vmatpush2.msra.mxu0 0.0
  %365 = vmatprep.subr.mxu0 0.0
  %366 = vmatpush2.msra.mxu0 0.0
  %367 = vmatprep.subr.mxu0 0.0
  %368 = vmatpush2.msra.mxu0 0.0
  %369 = vmatprep.subr.mxu0 0.0
  %370 = vmatpush2.msra.mxu0 0.0
  %371 = vmatprep.subr.mxu0 0.0
  %372 = vmatpush2.msra.mxu0 0.0
  %373 = vmatprep.subr.mxu0 0.0
  %374 = vmatpush2.msra.mxu0 0.0
  %375 = vmatprep.subr.mxu0 0.0
  %376 = vmatpush2.msra.mxu0 0.0
  %377 = vmatprep.subr.mxu0 0.0
  %378 = vmatpush2.msra.mxu0 0.0
  %379 = vmatprep.subr.mxu0 0.0
  %380 = vmatpush2.msra.mxu0 0.0
  %381 = vmatprep.subr.mxu0 0.0
  %382 = vmatpush2.msra.mxu0 0.0
  %383 = vmatprep.subr.mxu0 0.0
  %384 = vmatpush2.msra.mxu0 0.0
  %385 = vmatprep.subr.mxu0 0.0
  %386 = vmatpush2.msra.mxu0 0.0
  %387 = vmatprep.subr.mxu0 0.0
  %388 = vmatpush2.msra.mxu0 0.0
  %389 = vmatprep.subr.mxu0 0.0
  %390 = vmatpush2.msra.mxu0 0.0
  %391 = vmatprep.mubr.f32.mxu0 0.0
  %392 = vmatmul.mubr.f32.gmra.mxu0 %v325
  %v393 = vpop.f32.mrf.mxu0
  %v394 = vadd.f32 0.0, %v393
  %v395 = vpop.f32.mrf.mxu0
  %396 = vdwg.mxu0
  %v397 = vadd.f32 %v324, %v394
  %v398 = vtanh.pop %v397
  %v399 = vmul.f32 %v41, %v398
  %v400 = vadd.f32 %v42, %v399
  %v401 = vmul.f32 %v400, %v318
  %403 = vrot.lane.b32.xlu0 %v400, 64
  %v404 = vpop.permute.xlu0 %403
  %v406 = vmul.f32 %v400, %v404
  %408 = vrot.lane.b32.xlu0 %v406, 32
  %v409 = vpop.permute.xlu0 %408
  %v411 = vadd.f32 %v401, %v409
  %v412 = vtanh.pop %v411
  %414 = vrot.lane.b32.xlu0 %v412, 64
  %v415 = vpop.permute.xlu0 %414
  %v417 = vmul.f32 %v400, %v415
  %vm418 = vcmp.gt.s32.totalorder %v35, 1
  %v419 = vsel %vm418, 1, 0
  %420 = vset.pattern.permute.xlu0 0
  %421 = vperm.xlu0 %420, %v419
  %v422 = vpop.permute.xlu0 %421
  %vm423 = vcmp.eq.s32.totalorder %v422, 1
  %v424 = vsel %vm423, %v417, %v317
  %v425 = vsel %vm423, %v411, %v318
  %427 = vrot.lane.b32.xlu0 %v424, 32
  %v428 = vpop.permute.xlu0 %427
  %430 = vst.msk [vmem:[#allocation3 + $0x8] sm:$0xff] %vm62, %v428
  %v431 = vld [vmem:[#allocation2 + $0x10] sm:$0xff]
  %v432 = vsel %vm62, %v428, 0
  %434 = vmatprep.subr.mxu0 0.0
  %435 = vmatpush1.msra.mxu0 0.0
  %436 = vmatprep.subr.mxu0 0.0
  %437 = vmatpush1.msra.mxu0 0.0
  %438 = vmatprep.subr.mxu0 0.0
  %439 = vmatpush1.msra.mxu0 0.0
  %440 = vmatprep.subr.mxu0 0.0
  %441 = vmatpush1.msra.mxu0 0.0
  %442 = vmatprep.subr.mxu0 0.0
  %443 = vmatpush1.msra.mxu0 0.0
  %444 = vmatprep.subr.mxu0 0.0
  %445 = vmatpush1.msra.mxu0 0.0
  %446 = vmatprep.subr.mxu0 0.0
  %447 = vmatpush1.msra.mxu0 0.0
  %448 = vmatprep.subr.mxu0 0.0
  %449 = vmatpush1.msra.mxu0 0.0
  %450 = vmatprep.subr.mxu0 0.0
  %451 = vmatpush1.msra.mxu0 0.0
  %452 = vmatprep.subr.mxu0 0.0
  %453 = vmatpush1.msra.mxu0 0.0
  %454 = vmatprep.subr.mxu0 0.0
  %455 = vmatpush1.msra.mxu0 0.0
  %456 = vmatprep.subr.mxu0 0.0
  %457 = vmatpush1.msra.mxu0 0.0
  %458 = vmatprep.subr.mxu0 0.0
  %459 = vmatpush1.msra.mxu0 %v215
  %460 = vmatprep.subr.mxu0 0.0
  %461 = vmatpush1.msra.mxu0 %v214
  %462 = vmatprep.subr.mxu0 0.0
  %463 = vmatpush1.msra.mxu0 %v213
  %464 = vmatprep.subr.mxu0 0.0
  %465 = vmatpush1.msra.mxu0 %v212
  %466 = vmatprep.subr.mxu0 0.0
  %467 = vmatpush2.msra.mxu0 0.0
  %468 = vmatprep.subr.mxu0 0.0
  %469 = vmatpush2.msra.mxu0 0.0
  %470 = vmatprep.subr.mxu0 0.0
  %471 = vmatpush2.msra.mxu0 0.0
  %472 = vmatprep.subr.mxu0 0.0
  %473 = vmatpush2.msra.mxu0 0.0
  %474 = vmatprep.subr.mxu0 0.0
  %475 = vmatpush2.msra.mxu0 0.0
  %476 = vmatprep.subr.mxu0 0.0
  %477 = vmatpush2.msra.mxu0 0.0
  %478 = vmatprep.subr.mxu0 0.0
  %479 = vmatpush2.msra.mxu0 0.0
  %480 = vmatprep.subr.mxu0 0.0
  %481 = vmatpush2.msra.mxu0 0.0
  %482 = vmatprep.subr.mxu0 0.0
  %483 = vmatpush2.msra.mxu0 0.0
  %484 = vmatprep.subr.mxu0 0.0
  %485 = vmatpush2.msra.mxu0 0.0
  %486 = vmatprep.subr.mxu0 0.0
  %487 = vmatpush2.msra.mxu0 0.0
  %488 = vmatprep.subr.mxu0 0.0
  %489 = vmatpush2.msra.mxu0 0.0
  %490 = vmatprep.subr.mxu0 0.0
  %491 = vmatpush2.msra.mxu0 0.0
  %492 = vmatprep.subr.mxu0 0.0
  %493 = vmatpush2.msra.mxu0 0.0
  %494 = vmatprep.subr.mxu0 0.0
  %495 = vmatpush2.msra.mxu0 0.0
  %496 = vmatprep.subr.mxu0 0.0
  %497 = vmatpush2.msra.mxu0 0.0
  %498 = vmatprep.mubr.f32.mxu0 0.0
  %499 = vmatmul.mubr.f32.gmra.mxu0 %v432
  %v500 = vpop.f32.mrf.mxu0
  %v501 = vadd.f32 0.0, %v500
  %v502 = vpop.f32.mrf.mxu0
  %503 = vdwg.mxu0
  %v504 = vadd.f32 %v431, %v501
  %v505 = vtanh.pop %v504
  %v506 = vmul.f32 %v41, %v505
  %v507 = vadd.f32 %v42, %v506
  %v508 = vmul.f32 %v507, %v425
  %510 = vrot.lane.b32.xlu0 %v507, 64
  %v511 = vpop.permute.xlu0 %510
  %v513 = vmul.f32 %v507, %v511
  %515 = vrot.lane.b32.xlu0 %v513, 32
  %v516 = vpop.permute.xlu0 %515
  %v518 = vadd.f32 %v508, %v516
  %v519 = vtanh.pop %v518
  %521 = vrot.lane.b32.xlu0 %v519, 64
  %v522 = vpop.permute.xlu0 %521
  %v524 = vmul.f32 %v507, %v522
  %vm525 = vcmp.gt.s32.totalorder %v35, 2
  %v526 = vsel %vm525, 1, 0
  %527 = vset.pattern.permute.xlu0 0
  %528 = vperm.xlu0 %527, %v526
  %v529 = vpop.permute.xlu0 %528
  %vm530 = vcmp.eq.s32.totalorder %v529, 1
  %v531 = vsel %vm530, %v524, %v424
  %v532 = vsel %vm530, %v518, %v425
  %534 = vrot.lane.b32.xlu0 %v531, 32
  %v535 = vpop.permute.xlu0 %534
  %537 = vst.msk [vmem:[#allocation3 + $0x10] sm:$0xff] %vm62, %v535
  %v538 = vld [vmem:[#allocation2 + $0x18] sm:$0xff]
  %v539 = vsel %vm62, %v535, 0
  %541 = vmatprep.subr.mxu0 0.0
  %542 = vmatpush1.msra.mxu0 0.0
  %543 = vmatprep.subr.mxu0 0.0
  %544 = vmatpush1.msra.mxu0 0.0
  %545 = vmatprep.subr.mxu0 0.0
  %546 = vmatpush1.msra.mxu0 0.0
  %547 = vmatprep.subr.mxu0 0.0
  %548 = vmatpush1.msra.mxu0 0.0
  %549 = vmatprep.subr.mxu0 0.0
  %550 = vmatpush1.msra.mxu0 0.0
  %551 = vmatprep.subr.mxu0 0.0
  %552 = vmatpush1.msra.mxu0 0.0
  %553 = vmatprep.subr.mxu0 0.0
  %554 = vmatpush1.msra.mxu0 0.0
  %555 = vmatprep.subr.mxu0 0.0
  %556 = vmatpush1.msra.mxu0 0.0
  %557 = vmatprep.subr.mxu0 0.0
  %558 = vmatpush1.msra.mxu0 0.0
  %559 = vmatprep.subr.mxu0 0.0
  %560 = vmatpush1.msra.mxu0 0.0
  %561 = vmatprep.subr.mxu0 0.0
  %562 = vmatpush1.msra.mxu0 0.0
  %563 = vmatprep.subr.mxu0 0.0
  %564 = vmatpush1.msra.mxu0 0.0
  %565 = vmatprep.subr.mxu0 0.0
  %566 = vmatpush1.msra.mxu0 %v215
  %567 = vmatprep.subr.mxu0 0.0
  %568 = vmatpush1.msra.mxu0 %v214
  %569 = vmatprep.subr.mxu0 0.0
  %570 = vmatpush1.msra.mxu0 %v213
  %571 = vmatprep.subr.mxu0 0.0
  %572 = vmatpush1.msra.mxu0 %v212
  %573 = vmatprep.subr.mxu0 0.0
  %574 = vmatpush2.msra.mxu0 0.0
  %575 = vmatprep.subr.mxu0 0.0
  %576 = vmatpush2.msra.mxu0 0.0
  %577 = vmatprep.subr.mxu0 0.0
  %578 = vmatpush2.msra.mxu0 0.0
  %579 = vmatprep.subr.mxu0 0.0
  %580 = vmatpush2.msra.mxu0 0.0
  %581 = vmatprep.subr.mxu0 0.0
  %582 = vmatpush2.msra.mxu0 0.0
  %583 = vmatprep.subr.mxu0 0.0
  %584 = vmatpush2.msra.mxu0 0.0
  %585 = vmatprep.subr.mxu0 0.0
  %586 = vmatpush2.msra.mxu0 0.0
  %587 = vmatprep.subr.mxu0 0.0
  %588 = vmatpush2.msra.mxu0 0.0
  %589 = vmatprep.subr.mxu0 0.0
  %590 = vmatpush2.msra.mxu0 0.0
  %591 = vmatprep.subr.mxu0 0.0
  %592 = vmatpush2.msra.mxu0 0.0
  %593 = vmatprep.subr.mxu0 0.0
  %594 = vmatpush2.msra.mxu0 0.0
  %595 = vmatprep.subr.mxu0 0.0
  %596 = vmatpush2.msra.mxu0 0.0
  %597 = vmatprep.subr.mxu0 0.0
  %598 = vmatpush2.msra.mxu0 0.0
  %599 = vmatprep.subr.mxu0 0.0
  %600 = vmatpush2.msra.mxu0 0.0
  %601 = vmatprep.subr.mxu0 0.0
  %602 = vmatpush2.msra.mxu0 0.0
  %603 = vmatprep.subr.mxu0 0.0
  %604 = vmatpush2.msra.mxu0 0.0
  %605 = vmatprep.mubr.f32.mxu0 0.0
  %606 = vmatmul.mubr.f32.gmra.mxu0 %v539
  %v607 = vpop.f32.mrf.mxu0
  %v608 = vadd.f32 0.0, %v607
  %v609 = vpop.f32.mrf.mxu0
  %610 = vdwg.mxu0
  %v611 = vadd.f32 %v538, %v608
  %v612 = vtanh.pop %v611
  %v613 = vmul.f32 %v41, %v612
  %v614 = vadd.f32 %v42, %v613
  %v615 = vmul.f32 %v614, %v532
  %617 = vrot.lane.b32.xlu0 %v614, 64
  %v618 = vpop.permute.xlu0 %617
  %v620 = vmul.f32 %v614, %v618
  %622 = vrot.lane.b32.xlu0 %v620, 32
  %v623 = vpop.permute.xlu0 %622
  %v625 = vadd.f32 %v615, %v623
  %v626 = vtanh.pop %v625
  %628 = vrot.lane.b32.xlu0 %v626, 64
  %v629 = vpop.permute.xlu0 %628
  %v631 = vmul.f32 %v614, %v629
  %vm632 = vcmp.gt.s32.totalorder %v35, 3
  %v633 = vsel %vm632, 1, 0
  %634 = vset.pattern.permute.xlu0 0
  %635 = vperm.xlu0 %634, %v633
  %v636 = vpop.permute.xlu0 %635
  %vm637 = vcmp.eq.s32.totalorder %v636, 1
  %v638 = vsel %vm637, %v631, %v531
  %v639 = vsel %vm637, %v625, %v532
  %641 = vrot.lane.b32.xlu0 %v638, 32
  %v642 = vpop.permute.xlu0 %641
  %644 = vst.msk [vmem:[#allocation3 + $0x18] sm:$0xff] %vm62, %v642
  %v645 = vld [vmem:[#allocation2 + $0x20] sm:$0xff]
  %v646 = vsel %vm62, %v642, 0
  %648 = vmatprep.subr.mxu0 0.0
  %649 = vmatpush1.msra.mxu0 0.0
  %650 = vmatprep.subr.mxu0 0.0
  %651 = vmatpush1.msra.mxu0 0.0
  %652 = vmatprep.subr.mxu0 0.0
  %653 = vmatpush1.msra.mxu0 0.0
  %654 = vmatprep.subr.mxu0 0.0
  %655 = vmatpush1.msra.mxu0 0.0
  %656 = vmatprep.subr.mxu0 0.0
  %657 = vmatpush1.msra.mxu0 0.0
  %658 = vmatprep.subr.mxu0 0.0
  %659 = vmatpush1.msra.mxu0 0.0
  %660 = vmatprep.subr.mxu0 0.0
  %661 = vmatpush1.msra.mxu0 0.0
  %662 = vmatprep.subr.mxu0 0.0
  %663 = vmatpush1.msra.mxu0 0.0
  %664 = vmatprep.subr.mxu0 0.0
  %665 = vmatpush1.msra.mxu0 0.0
  %666 = vmatprep.subr.mxu0 0.0
  %667 = vmatpush1.msra.mxu0 0.0
  %668 = vmatprep.subr.mxu0 0.0
  %669 = vmatpush1.msra.mxu0 0.0
  %670 = vmatprep.subr.mxu0 0.0
  %671 = vmatpush1.msra.mxu0 0.0
  %672 = vmatprep.subr.mxu0 0.0
  %673 = vmatpush1.msra.mxu0 %v215
  %674 = vmatprep.subr.mxu0 0.0
  %675 = vmatpush1.msra.mxu0 %v214
  %676 = vmatprep.subr.mxu0 0.0
  %677 = vmatpush1.msra.mxu0 %v213
  %678 = vmatprep.subr.mxu0 0.0
  %679 = vmatpush1.msra.mxu0 %v212
  %680 = vmatprep.subr.mxu0 0.0
  %681 = vmatpush2.msra.mxu0 0.0
  %682 = vmatprep.subr.mxu0 0.0
  %683 = vmatpush2.msra.mxu0 0.0
  %684 = vmatprep.subr.mxu0 0.0
  %685 = vmatpush2.msra.mxu0 0.0
  %686 = vmatprep.subr.mxu0 0.0
  %687 = vmatpush2.msra.mxu0 0.0
  %688 = vmatprep.subr.mxu0 0.0
  %689 = vmatpush2.msra.mxu0 0.0
  %690 = vmatprep.subr.mxu0 0.0
  %691 = vmatpush2.msra.mxu0 0.0
  %692 = vmatprep.subr.mxu0 0.0
  %693 = vmatpush2.msra.mxu0 0.0
  %694 = vmatprep.subr.mxu0 0.0
  %695 = vmatpush2.msra.mxu0 0.0
  %696 = vmatprep.subr.mxu0 0.0
  %697 = vmatpush2.msra.mxu0 0.0
  %698 = vmatprep.subr.mxu0 0.0
  %699 = vmatpush2.msra.mxu0 0.0
  %700 = vmatprep.subr.mxu0 0.0
  %701 = vmatpush2.msra.mxu0 0.0
  %702 = vmatprep.subr.mxu0 0.0
  %703 = vmatpush2.msra.mxu0 0.0
  %704 = vmatprep.subr.mxu0 0.0
  %705 = vmatpush2.msra.mxu0 0.0
  %706 = vmatprep.subr.mxu0 0.0
  %707 = vmatpush2.msra.mxu0 0.0
  %708 = vmatprep.subr.mxu0 0.0
  %709 = vmatpush2.msra.mxu0 0.0
  %710 = vmatprep.subr.mxu0 0.0
  %711 = vmatpush2.msra.mxu0 0.0
  %712 = vmatprep.mubr.f32.mxu0 0.0
  %713 = vmatmul.mubr.f32.gmra.mxu0 %v646
  %v714 = vpop.f32.mrf.mxu0
  %v715 = vadd.f32 0.0, %v714
  %v716 = vpop.f32.mrf.mxu0
  %717 = vdwg.mxu0
  %v718 = vadd.f32 %v645, %v715
  %v719 = vtanh.pop %v718
  %v720 = vmul.f32 %v41, %v719
  %v721 = vadd.f32 %v42, %v720
  %v722 = vmul.f32 %v721, %v639
  %724 = vrot.lane.b32.xlu0 %v721, 64
  %v725 = vpop.permute.xlu0 %724
  %v727 = vmul.f32 %v721, %v725
  %729 = vrot.lane.b32.xlu0 %v727, 32
  %v730 = vpop.permute.xlu0 %729
  %v732 = vadd.f32 %v722, %v730
  %v733 = vtanh.pop %v732
  %735 = vrot.lane.b32.xlu0 %v733, 64
  %v736 = vpop.permute.xlu0 %735
  %v738 = vmul.f32 %v721, %v736
  %vm739 = vcmp.gt.s32.totalorder %v35, 4
  %v740 = vsel %vm739, 1, 0
  %741 = vset.pattern.permute.xlu0 0
  %742 = vperm.xlu0 %741, %v740
  %v743 = vpop.permute.xlu0 %742
  %vm744 = vcmp.eq.s32.totalorder %v743, 1
  %v745 = vsel %vm744, %v738, %v638
  %v746 = vsel %vm744, %v732, %v639
  %748 = vrot.lane.b32.xlu0 %v745, 32
  %v749 = vpop.permute.xlu0 %748
  %751 = vst.msk [vmem:[#allocation3 + $0x20] sm:$0xff] %vm62, %v749
  %v752 = vld [vmem:[#allocation2 + $0x28] sm:$0xff]
  %v753 = vsel %vm62, %v749, 0
  %755 = vmatprep.subr.mxu0 0.0
  %756 = vmatpush1.msra.mxu0 0.0
  %757 = vmatprep.subr.mxu0 0.0
  %758 = vmatpush1.msra.mxu0 0.0
  %759 = vmatprep.subr.mxu0 0.0
  %760 = vmatpush1.msra.mxu0 0.0
  %761 = vmatprep.subr.mxu0 0.0
  %762 = vmatpush1.msra.mxu0 0.0
  %763 = vmatprep.subr.mxu0 0.0
  %764 = vmatpush1.msra.mxu0 0.0
  %765 = vmatprep.subr.mxu0 0.0
  %766 = vmatpush1.msra.mxu0 0.0
  %767 = vmatprep.subr.mxu0 0.0
  %768 = vmatpush1.msra.mxu0 0.0
  %769 = vmatprep.subr.mxu0 0.0
  %770 = vmatpush1.msra.mxu0 0.0
  %771 = vmatprep.subr.mxu0 0.0
  %772 = vmatpush1.msra.mxu0 0.0
  %773 = vmatprep.subr.mxu0 0.0
  %774 = vmatpush1.msra.mxu0 0.0
  %775 = vmatprep.subr.mxu0 0.0
  %776 = vmatpush1.msra.mxu0 0.0
  %777 = vmatprep.subr.mxu0 0.0
  %778 = vmatpush1.msra.mxu0 0.0
  %779 = vmatprep.subr.mxu0 0.0
  %780 = vmatpush1.msra.mxu0 %v215
  %781 = vmatprep.subr.mxu0 0.0
  %782 = vmatpush1.msra.mxu0 %v214
  %783 = vmatprep.subr.mxu0 0.0
  %784 = vmatpush1.msra.mxu0 %v213
  %785 = vmatprep.subr.mxu0 0.0
  %786 = vmatpush1.msra.mxu0 %v212
  %787 = vmatprep.subr.mxu0 0.0
  %788 = vmatpush2.msra.mxu0 0.0
  %789 = vmatprep.subr.mxu0 0.0
  %790 = vmatpush2.msra.mxu0 0.0
  %791 = vmatprep.subr.mxu0 0.0
  %792 = vmatpush2.msra.mxu0 0.0
  %793 = vmatprep.subr.mxu0 0.0
  %794 = vmatpush2.msra.mxu0 0.0
  %795 = vmatprep.subr.mxu0 0.0
  %796 = vmatpush2.msra.mxu0 0.0
  %797 = vmatprep.subr.mxu0 0.0
  %798 = vmatpush2.msra.mxu0 0.0
  %799 = vmatprep.subr.mxu0 0.0
  %800 = vmatpush2.msra.mxu0 0.0
  %801 = vmatprep.subr.mxu0 0.0
  %802 = vmatpush2.msra.mxu0 0.0
  %803 = vmatprep.subr.mxu0 0.0
  %804 = vmatpush2.msra.mxu0 0.0
  %805 = vmatprep.subr.mxu0 0.0
  %806 = vmatpush2.msra.mxu0 0.0
  %807 = vmatprep.subr.mxu0 0.0
  %808 = vmatpush2.msra.mxu0 0.0
  %809 = vmatprep.subr.mxu0 0.0
  %810 = vmatpush2.msra.mxu0 0.0
  %811 = vmatprep.subr.mxu0 0.0
  %812 = vmatpush2.msra.mxu0 0.0
  %813 = vmatprep.subr.mxu0 0.0
  %814 = vmatpush2.msra.mxu0 0.0
  %815 = vmatprep.subr.mxu0 0.0
  %816 = vmatpush2.msra.mxu0 0.0
  %817 = vmatprep.subr.mxu0 0.0
  %818 = vmatpush2.msra.mxu0 0.0
  %819 = vmatprep.mubr.f32.mxu0 0.0
  %820 = vmatmul.mubr.f32.gmra.mxu0 %v753
  %v821 = vpop.f32.mrf.mxu0
  %v822 = vadd.f32 0.0, %v821
  %v823 = vpop.f32.mrf.mxu0
  %824 = vdwg.mxu0
  %v825 = vadd.f32 %v752, %v822
  %v826 = vtanh.pop %v825
  %v827 = vmul.f32 %v41, %v826
  %v828 = vadd.f32 %v42, %v827
  %v829 = vmul.f32 %v828, %v746
  %831 = vrot.lane.b32.xlu0 %v828, 64
  %v832 = vpop.permute.xlu0 %831
  %v834 = vmul.f32 %v828, %v832
  %836 = vrot.lane.b32.xlu0 %v834, 32
  %v837 = vpop.permute.xlu0 %836
  %v839 = vadd.f32 %v829, %v837
  %v840 = vtanh.pop %v839
  %842 = vrot.lane.b32.xlu0 %v840, 64
  %v843 = vpop.permute.xlu0 %842
  %v845 = vmul.f32 %v828, %v843
  %vm846 = vcmp.gt.s32.totalorder %v35, 5
  %v847 = vsel %vm846, 1, 0
  %848 = vset.pattern.permute.xlu0 0
  %849 = vperm.xlu0 %848, %v847
  %v850 = vpop.permute.xlu0 %849
  %vm851 = vcmp.eq.s32.totalorder %v850, 1
  %v852 = vsel %vm851, %v845, %v745
  %v853 = vsel %vm851, %v839, %v746
  %855 = vrot.lane.b32.xlu0 %v852, 32
  %v856 = vpop.permute.xlu0 %855
  %858 = vst.msk [vmem:[#allocation3 + $0x28] sm:$0xff] %vm62, %v856
  %v859 = vld [vmem:[#allocation2 + $0x30] sm:$0xff]
  %v860 = vsel %vm62, %v856, 0
  %862 = vmatprep.subr.mxu0 0.0
  %863 = vmatpush1.msra.mxu0 0.0
  %864 = vmatprep.subr.mxu0 0.0
  %865 = vmatpush1.msra.mxu0 0.0
  %866 = vmatprep.subr.mxu0 0.0
  %867 = vmatpush1.msra.mxu0 0.0
  %868 = vmatprep.subr.mxu0 0.0
  %869 = vmatpush1.msra.mxu0 0.0
  %870 = vmatprep.subr.mxu0 0.0
  %871 = vmatpush1.msra.mxu0 0.0
  %872 = vmatprep.subr.mxu0 0.0
  %873 = vmatpush1.msra.mxu0 0.0
  %874 = vmatprep.subr.mxu0 0.0
  %875 = vmatpush1.msra.mxu0 0.0
  %876 = vmatprep.subr.mxu0 0.0
  %877 = vmatpush1.msra.mxu0 0.0
  %878 = vmatprep.subr.mxu0 0.0
  %879 = vmatpush1.msra.mxu0 0.0
  %880 = vmatprep.subr.mxu0 0.0
  %881 = vmatpush1.msra.mxu0 0.0
  %882 = vmatprep.subr.mxu0 0.0
  %883 = vmatpush1.msra.mxu0 0.0
  %884 = vmatprep.subr.mxu0 0.0
  %885 = vmatpush1.msra.mxu0 0.0
  %886 = vmatprep.subr.mxu0 0.0
  %887 = vmatpush1.msra.mxu0 %v215
  %888 = vmatprep.subr.mxu0 0.0
  %889 = vmatpush1.msra.mxu0 %v214
  %890 = vmatprep.subr.mxu0 0.0
  %891 = vmatpush1.msra.mxu0 %v213
  %892 = vmatprep.subr.mxu0 0.0
  %893 = vmatpush1.msra.mxu0 %v212
  %894 = vmatprep.subr.mxu0 0.0
  %895 = vmatpush2.msra.mxu0 0.0
  %896 = vmatprep.subr.mxu0 0.0
  %897 = vmatpush2.msra.mxu0 0.0
  %898 = vmatprep.subr.mxu0 0.0
  %899 = vmatpush2.msra.mxu0 0.0
  %900 = vmatprep.subr.mxu0 0.0
  %901 = vmatpush2.msra.mxu0 0.0
  %902 = vmatprep.subr.mxu0 0.0
  %903 = vmatpush2.msra.mxu0 0.0
  %904 = vmatprep.subr.mxu0 0.0
  %905 = vmatpush2.msra.mxu0 0.0
  %906 = vmatprep.subr.mxu0 0.0
  %907 = vmatpush2.msra.mxu0 0.0
  %908 = vmatprep.subr.mxu0 0.0
  %909 = vmatpush2.msra.mxu0 0.0
  %910 = vmatprep.subr.mxu0 0.0
  %911 = vmatpush2.msra.mxu0 0.0
  %912 = vmatprep.subr.mxu0 0.0
  %913 = vmatpush2.msra.mxu0 0.0
  %914 = vmatprep.subr.mxu0 0.0
  %915 = vmatpush2.msra.mxu0 0.0
  %916 = vmatprep.subr.mxu0 0.0
  %917 = vmatpush2.msra.mxu0 0.0
  %918 = vmatprep.subr.mxu0 0.0
  %919 = vmatpush2.msra.mxu0 0.0
  %920 = vmatprep.subr.mxu0 0.0
  %921 = vmatpush2.msra.mxu0 0.0
  %922 = vmatprep.subr.mxu0 0.0
  %923 = vmatpush2.msra.mxu0 0.0
  %924 = vmatprep.subr.mxu0 0.0
  %925 = vmatpush2.msra.mxu0 0.0
  %926 = vmatprep.mubr.f32.mxu0 0.0
  %927 = vmatmul.mubr.f32.gmra.mxu0 %v860
  %v928 = vpop.f32.mrf.mxu0
  %v929 = vadd.f32 0.0, %v928
  %v930 = vpop.f32.mrf.mxu0
  %931 = vdwg.mxu0
  %v932 = vadd.f32 %v859, %v929
  %v933 = vtanh.pop %v932
  %v934 = vmul.f32 %v41, %v933
  %v935 = vadd.f32 %v42, %v934
  %v936 = vmul.f32 %v935, %v853
  %938 = vrot.lane.b32.xlu0 %v935, 64
  %v939 = vpop.permute.xlu0 %938
  %v941 = vmul.f32 %v935, %v939
  %943 = vrot.lane.b32.xlu0 %v941, 32
  %v944 = vpop.permute.xlu0 %943
  %v946 = vadd.f32 %v936, %v944
  %v947 = vtanh.pop %v946
  %949 = vrot.lane.b32.xlu0 %v947, 64
  %v950 = vpop.permute.xlu0 %949
  %v952 = vmul.f32 %v935, %v950
  %vm953 = vcmp.gt.s32.totalorder %v35, 6
  %v954 = vsel %vm953, 1, 0
  %955 = vset.pattern.permute.xlu0 0
  %956 = vperm.xlu0 %955, %v954
  %v957 = vpop.permute.xlu0 %956
  %vm958 = vcmp.eq.s32.totalorder %v957, 1
  %v959 = vsel %vm958, %v952, %v852
  %v960 = vsel %vm958, %v946, %v853
  %962 = vrot.lane.b32.xlu0 %v959, 32
  %v963 = vpop.permute.xlu0 %962
  %965 = vst.msk [vmem:[#allocation3 + $0x30] sm:$0xff] %vm62, %v963
  %v966 = vld [vmem:[#allocation2 + $0x38] sm:$0xff]
  %v967 = vsel %vm62, %v963, 0
  %969 = vmatprep.subr.mxu0 0.0
  %970 = vmatpush1.msra.mxu0 0.0
  %971 = vmatprep.subr.mxu0 0.0
  %972 = vmatpush1.msra.mxu0 0.0
  %973 = vmatprep.subr.mxu0 0.0
  %974 = vmatpush1.msra.mxu0 0.0
  %975 = vmatprep.subr.mxu0 0.0
  %976 = vmatpush1.msra.mxu0 0.0
  %977 = vmatprep.subr.mxu0 0.0
  %978 = vmatpush1.msra.mxu0 0.0
  %979 = vmatprep.subr.mxu0 0.0
  %980 = vmatpush1.msra.mxu0 0.0
  %981 = vmatprep.subr.mxu0 0.0
  %982 = vmatpush1.msra.mxu0 0.0
  %983 = vmatprep.subr.mxu0 0.0
  %984 = vmatpush1.msra.mxu0 0.0
  %985 = vmatprep.subr.mxu0 0.0
  %986 = vmatpush1.msra.mxu0 0.0
  %987 = vmatprep.subr.mxu0 0.0
  %988 = vmatpush1.msra.mxu0 0.0
  %989 = vmatprep.subr.mxu0 0.0
  %990 = vmatpush1.msra.mxu0 0.0
  %991 = vmatprep.subr.mxu0 0.0
  %992 = vmatpush1.msra.mxu0 0.0
  %993 = vmatprep.subr.mxu0 0.0
  %994 = vmatpush1.msra.mxu0 %v215
  %995 = vmatprep.subr.mxu0 0.0
  %996 = vmatpush1.msra.mxu0 %v214
  %997 = vmatprep.subr.mxu0 0.0
  %998 = vmatpush1.msra.mxu0 %v213
  %999 = vmatprep.subr.mxu0 0.0
  %1000 = vmatpush1.msra.mxu0 %v212
  %1001 = vmatprep.subr.mxu0 0.0
  %1002 = vmatpush2.msra.mxu0 0.0
  %1003 = vmatprep.subr.mxu0 0.0
  %1004 = vmatpush2.msra.mxu0 0.0
  %1005 = vmatprep.subr.mxu0 0.0
  %1006 = vmatpush2.msra.mxu0 0.0
  %1007 = vmatprep.subr.mxu0 0.0
  %1008 = vmatpush2.msra.mxu0 0.0
  %1009 = vmatprep.subr.mxu0 0.0
  %1010 = vmatpush2.msra.mxu0 0.0
  %1011 = vmatprep.subr.mxu0 0.0
  %1012 = vmatpush2.msra.mxu0 0.0
  %1013 = vmatprep.subr.mxu0 0.0
  %1014 = vmatpush2.msra.mxu0 0.0
  %1015 = vmatprep.subr.mxu0 0.0
  %1016 = vmatpush2.msra.mxu0 0.0
  %1017 = vmatprep.subr.mxu0 0.0
  %1018 = vmatpush2.msra.mxu0 0.0
  %1019 = vmatprep.subr.mxu0 0.0
  %1020 = vmatpush2.msra.mxu0 0.0
  %1021 = vmatprep.subr.mxu0 0.0
  %1022 = vmatpush2.msra.mxu0 0.0
  %1023 = vmatprep.subr.mxu0 0.0
  %1024 = vmatpush2.msra.mxu0 0.0
  %1025 = vmatprep.subr.mxu0 0.0
  %1026 = vmatpush2.msra.mxu0 0.0
  %1027 = vmatprep.subr.mxu0 0.0
  %1028 = vmatpush2.msra.mxu0 0.0
  %1029 = vmatprep.subr.mxu0 0.0
  %1030 = vmatpush2.msra.mxu0 0.0
  %1031 = vmatprep.subr.mxu0 0.0
  %1032 = vmatpush2.msra.mxu0 0.0
  %1033 = vmatprep.mubr.f32.mxu0 0.0
  %1034 = vmatmul.mubr.f32.gmra.mxu0 %v967
  %v1035 = vpop.f32.mrf.mxu0
  %v1036 = vadd.f32 0.0, %v1035
  %v1037 = vpop.f32.mrf.mxu0
  %1038 = vdwg.mxu0
  %v1039 = vadd.f32 %v966, %v1036
  %v1040 = vtanh.pop %v1039
  %v1041 = vmul.f32 %v41, %v1040
  %v1042 = vadd.f32 %v42, %v1041
  %v1043 = vmul.f32 %v1042, %v960
  %1045 = vrot.lane.b32.xlu0 %v1042, 64
  %v1046 = vpop.permute.xlu0 %1045
  %v1048 = vmul.f32 %v1042, %v1046
  %1050 = vrot.lane.b32.xlu0 %v1048, 32
  %v1051 = vpop.permute.xlu0 %1050
  %v1053 = vadd.f32 %v1043, %v1051
  %v1054 = vtanh.pop %v1053
  %1056 = vrot.lane.b32.xlu0 %v1054, 64
  %v1057 = vpop.permute.xlu0 %1056
  %v1059 = vmul.f32 %v1042, %v1057
  %vm1060 = vcmp.gt.s32.totalorder %v35, 7
  %v1061 = vsel %vm1060, 1, 0
  %1062 = vset.pattern.permute.xlu0 0
  %1063 = vperm.xlu0 %1062, %v1061
  %v1064 = vpop.permute.xlu0 %1063
  %vm1065 = vcmp.eq.s32.totalorder %v1064, 1
  %v1066 = vsel %vm1065, %v1059, %v959
  %1068 = vrot.lane.b32.xlu0 %v1066, 32
  %v1069 = vpop.permute.xlu0 %1068
  %1071 = vst.msk [vmem:[#allocation3 + $0x38] sm:$0xff] %vm62, %v1069
  %v1072 = vld [vmem:[#allocation3] sm:$0xff]
  %v1073 = vld [vmem:[#allocation3 + $0x8] sm:$0xff]
  %v1074 = vld [vmem:[#allocation3 + $0x10] sm:$0xff]
  %v1075 = vld [vmem:[#allocation3 + $0x18] sm:$0xff]
  %v1076 = vld [vmem:[#allocation3 + $0x20] sm:$0xff]
  %v1077 = vld [vmem:[#allocation3 + $0x28] sm:$0xff]
  %v1078 = vld [vmem:[#allocation3 + $0x30] sm:$0xff]
  %v1079 = vld [vmem:[#allocation3 + $0x38] sm:$0xff]
  %v1080 = vld [vmem:[%s5] sm:$0xff]
  %v1081 = vld [vmem:[%s5 + $0x8] sm:$0xff]
  %v1082 = vld [vmem:[%s5 + $0x10] sm:$0xff]
  %v1083 = vld [vmem:[%s5 + $0x18] sm:$0xff]
  %v1084 = vld [vmem:[%s7] sm:$0x1]
  %v1086 = vlaneseq
  %v1087 = vshrl.u32 %v1086, 7
  %v1088 = vsub.s32 0, %v1087
  %v1089 = vrot.slane %v1084, %v1088
  %v1092 = vsel %vm62, %v1072, 0
  %v1095 = vsel %vm62, %v1073, 0
  %v1098 = vsel %vm62, %v1074, 0
  %v1101 = vsel %vm62, %v1075, 0
  %v1104 = vsel %vm62, %v1076, 0
  %v1107 = vsel %vm62, %v1077, 0
  %v1110 = vsel %vm62, %v1078, 0
  %v1113 = vsel %vm62, %v1079, 0
  %1115 = vmatprep.subr.mxu0 0.0
  %1116 = vmatpush1.msra.mxu0 0.0
  %1117 = vmatprep.subr.mxu0 0.0
  %1118 = vmatpush1.msra.mxu0 0.0
  %1119 = vmatprep.subr.mxu0 0.0
  %1120 = vmatpush1.msra.mxu0 0.0
  %1121 = vmatprep.subr.mxu0 0.0
  %1122 = vmatpush1.msra.mxu0 0.0
  %1123 = vmatprep.subr.mxu0 0.0
  %1124 = vmatpush1.msra.mxu0 0.0
  %1125 = vmatprep.subr.mxu0 0.0
  %1126 = vmatpush1.msra.mxu0 0.0
  %1127 = vmatprep.subr.mxu0 0.0
  %1128 = vmatpush1.msra.mxu0 0.0
  %1129 = vmatprep.subr.mxu0 0.0
  %1130 = vmatpush1.msra.mxu0 0.0
  %1131 = vmatprep.subr.mxu0 0.0
  %1132 = vmatpush1.msra.mxu0 0.0
  %1133 = vmatprep.subr.mxu0 0.0
  %1134 = vmatpush1.msra.mxu0 0.0
  %1135 = vmatprep.subr.mxu0 0.0
  %1136 = vmatpush1.msra.mxu0 0.0
  %1137 = vmatprep.subr.mxu0 0.0
  %1138 = vmatpush1.msra.mxu0 0.0
  %1139 = vmatprep.subr.mxu0 0.0
  %1140 = vmatpush1.msra.mxu0 %v1083
  %1141 = vmatprep.subr.mxu0 0.0
  %1142 = vmatpush1.msra.mxu0 %v1082
  %1143 = vmatprep.subr.mxu0 0.0
  %1144 = vmatpush1.msra.mxu0 %v1081
  %1145 = vmatprep.subr.mxu0 0.0
  %1146 = vmatpush1.msra.mxu0 %v1080
  %1147 = vmatprep.subr.mxu0 0.0
  %1148 = vmatpush2.msra.mxu0 0.0
  %1149 = vmatprep.subr.mxu0 0.0
  %1150 = vmatpush2.msra.mxu0 0.0
  %1151 = vmatprep.subr.mxu0 0.0
  %1152 = vmatpush2.msra.mxu0 0.0
  %1153 = vmatprep.subr.mxu0 0.0
  %1154 = vmatpush2.msra.mxu0 0.0
  %1155 = vmatprep.subr.mxu0 0.0
  %1156 = vmatpush2.msra.mxu0 0.0
  %1157 = vmatprep.subr.mxu0 0.0
  %1158 = vmatpush2.msra.mxu0 0.0
  %1159 = vmatprep.subr.mxu0 0.0
  %1160 = vmatpush2.msra.mxu0 0.0
  %1161 = vmatprep.subr.mxu0 0.0
  %1162 = vmatpush2.msra.mxu0 0.0
  %1163 = vmatprep.subr.mxu0 0.0
  %1164 = vmatpush2.msra.mxu0 0.0
  %1165 = vmatprep.subr.mxu0 0.0
  %1166 = vmatpush2.msra.mxu0 0.0
  %1167 = vmatprep.subr.mxu0 0.0
  %1168 = vmatpush2.msra.mxu0 0.0
  %1169 = vmatprep.subr.mxu0 0.0
  %1170 = vmatpush2.msra.mxu0 0.0
  %1171 = vmatprep.subr.mxu0 0.0
  %1172 = vmatpush2.msra.mxu0 0.0
  %1173 = vmatprep.subr.mxu0 0.0
  %1174 = vmatpush2.msra.mxu0 0.0
  %1175 = vmatprep.subr.mxu0 0.0
  %1176 = vmatpush2.msra.mxu0 0.0
  %1177 = vmatprep.subr.mxu0 0.0
  %1178 = vmatpush2.msra.mxu0 0.0
  %1179 = vmatprep.mubr.f32.mxu0 0.0
  %1180 = vmatmul.mubr.f32.gmra.mxu0 %v1092
  %v1181 = vpop.f32.mrf.mxu0
  %v1182 = vadd.f32 %v1089, %v1181
  %v1183 = vpop.f32.mrf.mxu0
  %1184 = vmatprep.mubr.f32.mxu0 0.0
  %1185 = vmatmul.mubr.f32.gmra.mxu0 %v1095
  %v1186 = vpop.f32.mrf.mxu0
  %v1187 = vadd.f32 %v1089, %v1186
  %v1188 = vpop.f32.mrf.mxu0
  %1189 = vmatprep.mubr.f32.mxu0 0.0
  %1190 = vmatmul.mubr.f32.gmra.mxu0 %v1098
  %v1191 = vpop.f32.mrf.mxu0
  %v1192 = vadd.f32 %v1089, %v1191
  %v1193 = vpop.f32.mrf.mxu0
  %1194 = vmatprep.mubr.f32.mxu0 0.0
  %1195 = vmatmul.mubr.f32.gmra.mxu0 %v1101
  %v1196 = vpop.f32.mrf.mxu0
  %v1197 = vadd.f32 %v1089, %v1196
  %v1198 = vpop.f32.mrf.mxu0
  %1199 = vmatprep.mubr.f32.mxu0 0.0
  %1200 = vmatmul.mubr.f32.gmra.mxu0 %v1104
  %v1201 = vpop.f32.mrf.mxu0
  %v1202 = vadd.f32 %v1089, %v1201
  %v1203 = vpop.f32.mrf.mxu0
  %1204 = vmatprep.mubr.f32.mxu0 0.0
  %1205 = vmatmul.mubr.f32.gmra.mxu0 %v1107
  %v1206 = vpop.f32.mrf.mxu0
  %v1207 = vadd.f32 %v1089, %v1206
  %v1208 = vpop.f32.mrf.mxu0
  %1209 = vmatprep.mubr.f32.mxu0 0.0
  %1210 = vmatmul.mubr.f32.gmra.mxu0 %v1110
  %v1211 = vpop.f32.mrf.mxu0
  %v1212 = vadd.f32 %v1089, %v1211
  %v1213 = vpop.f32.mrf.mxu0
  %1214 = vmatprep.mubr.f32.mxu0 0.0
  %1215 = vmatmul.mubr.f32.gmra.mxu0 %v1113
  %v1216 = vpop.f32.mrf.mxu0
  %v1217 = vadd.f32 %v1089, %v1216
  %v1218 = vpop.f32.mrf.mxu0
  %1219 = vdwg.mxu0
  %v1220 = vmul.f32 %v1182, %v41
  %v1221 = vmul.f32 %v1187, %v41
  %v1222 = vmul.f32 %v1192, %v41
  %v1223 = vmul.f32 %v1197, %v41
  %v1224 = vmul.f32 %v1202, %v41
  %v1225 = vmul.f32 %v1207, %v41
  %v1226 = vmul.f32 %v1212, %v41
  %v1227 = vmul.f32 %v1217, %v41
  %1228 = vst [vmem:[#allocation2] sm:$0xff] %v1220
  %1229 = vst [vmem:[#allocation2 + $0x8] sm:$0xff] %v1221
  %1230 = vst [vmem:[#allocation2 + $0x10] sm:$0xff] %v1222
  %1231 = vst [vmem:[#allocation2 + $0x18] sm:$0xff] %v1223
  %1232 = vst [vmem:[#allocation2 + $0x20] sm:$0xff] %v1224
  %1233 = vst [vmem:[#allocation2 + $0x28] sm:$0xff] %v1225
  %1234 = vst [vmem:[#allocation2 + $0x30] sm:$0xff] %v1226
  %1235 = vst [vmem:[#allocation2 + $0x38] sm:$0xff] %v1227
  %v1236 = vld [vmem:[%s6] sm:$0xff]
  %v1237 = vld [vmem:[%s6 + $0x8] sm:$0xff]
  %v1238 = vld [vmem:[%s6 + $0x10] sm:$0xff]
  %v1239 = vld [vmem:[%s6 + $0x18] sm:$0xff]
  %v1240 = vmul.f32 %v1236, %v41
  %v1241 = vmul.f32 %v1237, %v41
  %v1242 = vmul.f32 %v1238, %v41
  %v1243 = vmul.f32 %v1239, %v41
  %v1244 = vld [vmem:[#allocation2] sm:$0xff]
  %1245 = vmatprep.subr.mxu0 0.0
  %1246 = vmatpush1.msra.mxu0 0.0
  %1247 = vmatprep.subr.mxu0 0.0
  %1248 = vmatpush1.msra.mxu0 0.0
  %1249 = vmatprep.subr.mxu0 0.0
  %1250 = vmatpush1.msra.mxu0 0.0
  %1251 = vmatprep.subr.mxu0 0.0
  %1252 = vmatpush1.msra.mxu0 0.0
  %1253 = vmatprep.subr.mxu0 0.0
  %1254 = vmatpush1.msra.mxu0 0.0
  %1255 = vmatprep.subr.mxu0 0.0
  %1256 = vmatpush1.msra.mxu0 0.0
  %1257 = vmatprep.subr.mxu0 0.0
  %1258 = vmatpush1.msra.mxu0 0.0
  %1259 = vmatprep.subr.mxu0 0.0
  %1260 = vmatpush1.msra.mxu0 0.0
  %1261 = vmatprep.subr.mxu0 0.0
  %1262 = vmatpush1.msra.mxu0 0.0
  %1263 = vmatprep.subr.mxu0 0.0
  %1264 = vmatpush1.msra.mxu0 0.0
  %1265 = vmatprep.subr.mxu0 0.0
  %1266 = vmatpush1.msra.mxu0 0.0
  %1267 = vmatprep.subr.mxu0 0.0
  %1268 = vmatpush1.msra.mxu0 0.0
  %1269 = vmatprep.subr.mxu0 0.0
  %1270 = vmatpush1.msra.mxu0 %v1243
  %1271 = vmatprep.subr.mxu0 0.0
  %1272 = vmatpush1.msra.mxu0 %v1242
  %1273 = vmatprep.subr.mxu0 0.0
  %1274 = vmatpush1.msra.mxu0 %v1241
  %1275 = vmatprep.subr.mxu0 0.0
  %1276 = vmatpush1.msra.mxu0 %v1240
  %1277 = vmatprep.subr.mxu0 0.0
  %1278 = vmatpush2.msra.mxu0 0.0
  %1279 = vmatprep.subr.mxu0 0.0
  %1280 = vmatpush2.msra.mxu0 0.0
  %1281 = vmatprep.subr.mxu0 0.0
  %1282 = vmatpush2.msra.mxu0 0.0
  %1283 = vmatprep.subr.mxu0 0.0
  %1284 = vmatpush2.msra.mxu0 0.0
  %1285 = vmatprep.subr.mxu0 0.0
  %1286 = vmatpush2.msra.mxu0 0.0
  %1287 = vmatprep.subr.mxu0 0.0
  %1288 = vmatpush2.msra.mxu0 0.0
  %1289 = vmatprep.subr.mxu0 0.0
  %1290 = vmatpush2.msra.mxu0 0.0
  %1291 = vmatprep.subr.mxu0 0.0
  %1292 = vmatpush2.msra.mxu0 0.0
  %1293 = vmatprep.subr.mxu0 0.0
  %1294 = vmatpush2.msra.mxu0 0.0
  %1295 = vmatprep.subr.mxu0 0.0
  %1296 = vmatpush2.msra.mxu0 0.0
  %1297 = vmatprep.subr.mxu0 0.0
  %1298 = vmatpush2.msra.mxu0 0.0
  %1299 = vmatprep.subr.mxu0 0.0
  %1300 = vmatpush2.msra.mxu0 0.0
  %1301 = vmatprep.subr.mxu0 0.0
  %1302 = vmatpush2.msra.mxu0 0.0
  %1303 = vmatprep.subr.mxu0 0.0
  %1304 = vmatpush2.msra.mxu0 0.0
  %1305 = vmatprep.subr.mxu0 0.0
  %1306 = vmatpush2.msra.mxu0 0.0
  %1307 = vmatprep.subr.mxu0 0.0
  %1308 = vmatpush2.msra.mxu0 0.0
  %1309 = vmatprep.mubr.f32.mxu0 0.0
  %1310 = vmatmul.mubr.f32.gmra.mxu0 %v218
  %v1311 = vpop.f32.mrf.mxu0
  %v1312 = vadd.f32 0.0, %v1311
  %v1313 = vpop.f32.mrf.mxu0
  %1314 = vdwg.mxu0
  %v1315 = vadd.f32 %v1244, %v1312
  %v1316 = vtanh.pop %v1315
  %v1317 = vmul.f32 %v41, %v1316
  %v1318 = vadd.f32 %v42, %v1317
  %v1319 = vmul.f32 %v1318, 0.0
  %1321 = vrot.lane.b32.xlu0 %v1318, 64
  %v1322 = vpop.permute.xlu0 %1321
  %v1324 = vmul.f32 %v1318, %v1322
  %1326 = vrot.lane.b32.xlu0 %v1324, 32
  %v1327 = vpop.permute.xlu0 %1326
  %v1329 = vadd.f32 %v1319, %v1327
  %v1330 = vtanh.pop %v1329
  %1332 = vrot.lane.b32.xlu0 %v1330, 64
  %v1333 = vpop.permute.xlu0 %1332
  %v1335 = vmul.f32 %v1318, %v1333
  %v1336 = vsel %vm316, %v1335, 0.0
  %v1337 = vsel %vm316, %v1329, 0.0
  %v1338 = vld [vmem:[#allocation2 + $0x8] sm:$0xff]
  %1340 = vrot.lane.b32.xlu0 %v1336, 32
  %v1341 = vpop.permute.xlu0 %1340
  %v1342 = vsel %vm62, %v1341, 0
  %1344 = vmatprep.subr.mxu0 0.0
  %1345 = vmatpush1.msra.mxu0 0.0
  %1346 = vmatprep.subr.mxu0 0.0
  %1347 = vmatpush1.msra.mxu0 0.0
  %1348 = vmatprep.subr.mxu0 0.0
  %1349 = vmatpush1.msra.mxu0 0.0
  %1350 = vmatprep.subr.mxu0 0.0
  %1351 = vmatpush1.msra.mxu0 0.0
  %1352 = vmatprep.subr.mxu0 0.0
  %1353 = vmatpush1.msra.mxu0 0.0
  %1354 = vmatprep.subr.mxu0 0.0
  %1355 = vmatpush1.msra.mxu0 0.0
  %1356 = vmatprep.subr.mxu0 0.0
  %1357 = vmatpush1.msra.mxu0 0.0
  %1358 = vmatprep.subr.mxu0 0.0
  %1359 = vmatpush1.msra.mxu0 0.0
  %1360 = vmatprep.subr.mxu0 0.0
  %1361 = vmatpush1.msra.mxu0 0.0
  %1362 = vmatprep.subr.mxu0 0.0
  %1363 = vmatpush1.msra.mxu0 0.0
  %1364 = vmatprep.subr.mxu0 0.0
  %1365 = vmatpush1.msra.mxu0 0.0
  %1366 = vmatprep.subr.mxu0 0.0
  %1367 = vmatpush1.msra.mxu0 0.0
  %1368 = vmatprep.subr.mxu0 0.0
  %1369 = vmatpush1.msra.mxu0 %v1243
  %1370 = vmatprep.subr.mxu0 0.0
  %1371 = vmatpush1.msra.mxu0 %v1242
  %1372 = vmatprep.subr.mxu0 0.0
  %1373 = vmatpush1.msra.mxu0 %v1241
  %1374 = vmatprep.subr.mxu0 0.0
  %1375 = vmatpush1.msra.mxu0 %v1240
  %1376 = vmatprep.subr.mxu0 0.0
  %1377 = vmatpush2.msra.mxu0 0.0
  %1378 = vmatprep.subr.mxu0 0.0
  %1379 = vmatpush2.msra.mxu0 0.0
  %1380 = vmatprep.subr.mxu0 0.0
  %1381 = vmatpush2.msra.mxu0 0.0
  %1382 = vmatprep.subr.mxu0 0.0
  %1383 = vmatpush2.msra.mxu0 0.0
  %1384 = vmatprep.subr.mxu0 0.0
  %1385 = vmatpush2.msra.mxu0 0.0
  %1386 = vmatprep.subr.mxu0 0.0
  %1387 = vmatpush2.msra.mxu0 0.0
  %1388 = vmatprep.subr.mxu0 0.0
  %1389 = vmatpush2.msra.mxu0 0.0
  %1390 = vmatprep.subr.mxu0 0.0
  %1391 = vmatpush2.msra.mxu0 0.0
  %1392 = vmatprep.subr.mxu0 0.0
  %1393 = vmatpush2.msra.mxu0 0.0
  %1394 = vmatprep.subr.mxu0 0.0
  %1395 = vmatpush2.msra.mxu0 0.0
  %1396 = vmatprep.subr.mxu0 0.0
  %1397 = vmatpush2.msra.mxu0 0.0
  %1398 = vmatprep.subr.mxu0 0.0
  %1399 = vmatpush2.msra.mxu0 0.0
  %1400 = vmatprep.subr.mxu0 0.0
  %1401 = vmatpush2.msra.mxu0 0.0
  %1402 = vmatprep.subr.mxu0 0.0
  %1403 = vmatpush2.msra.mxu0 0.0
  %1404 = vmatprep.subr.mxu0 0.0
  %1405 = vmatpush2.msra.mxu0 0.0
  %1406 = vmatprep.subr.mxu0 0.0
  %1407 = vmatpush2.msra.mxu0 0.0
  %1408 = vmatprep.mubr.f32.mxu0 0.0
  %1409 = vmatmul.mubr.f32.gmra.mxu0 %v1342
  %v1410 = vpop.f32.mrf.mxu0
  %v1411 = vadd.f32 0.0, %v1410
  %v1412 = vpop.f32.mrf.mxu0
  %1413 = vdwg.mxu0
  %v1414 = vadd.f32 %v1338, %v1411
  %v1415 = vtanh.pop %v1414
  %v1416 = vmul.f32 %v41, %v1415
  %v1417 = vadd.f32 %v42, %v1416
  %v1418 = vmul.f32 %v1417, %v1337
  %1420 = vrot.lane.b32.xlu0 %v1417, 64
  %v1421 = vpop.permute.xlu0 %1420
  %v1423 = vmul.f32 %v1417, %v1421
  %1425 = vrot.lane.b32.xlu0 %v1423, 32
  %v1426 = vpop.permute.xlu0 %1425
  %v1428 = vadd.f32 %v1418, %v1426
  %v1429 = vtanh.pop %v1428
  %1431 = vrot.lane.b32.xlu0 %v1429, 64
  %v1432 = vpop.permute.xlu0 %1431
  %v1434 = vmul.f32 %v1417, %v1432
  %v1435 = vsel %vm423, %v1434, %v1336
  %v1436 = vsel %vm423, %v1428, %v1337
  %v1437 = vld [vmem:[#allocation2 + $0x10] sm:$0xff]
  %1439 = vrot.lane.b32.xlu0 %v1435, 32
  %v1440 = vpop.permute.xlu0 %1439
  %v1441 = vsel %vm62, %v1440, 0
  %1443 = vmatprep.subr.mxu0 0.0
  %1444 = vmatpush1.msra.mxu0 0.0
  %1445 = vmatprep.subr.mxu0 0.0
  %1446 = vmatpush1.msra.mxu0 0.0
  %1447 = vmatprep.subr.mxu0 0.0
  %1448 = vmatpush1.msra.mxu0 0.0
  %1449 = vmatprep.subr.mxu0 0.0
  %1450 = vmatpush1.msra.mxu0 0.0
  %1451 = vmatprep.subr.mxu0 0.0
  %1452 = vmatpush1.msra.mxu0 0.0
  %1453 = vmatprep.subr.mxu0 0.0
  %1454 = vmatpush1.msra.mxu0 0.0
  %1455 = vmatprep.subr.mxu0 0.0
  %1456 = vmatpush1.msra.mxu0 0.0
  %1457 = vmatprep.subr.mxu0 0.0
  %1458 = vmatpush1.msra.mxu0 0.0
  %1459 = vmatprep.subr.mxu0 0.0
  %1460 = vmatpush1.msra.mxu0 0.0
  %1461 = vmatprep.subr.mxu0 0.0
  %1462 = vmatpush1.msra.mxu0 0.0
  %1463 = vmatprep.subr.mxu0 0.0
  %1464 = vmatpush1.msra.mxu0 0.0
  %1465 = vmatprep.subr.mxu0 0.0
  %1466 = vmatpush1.msra.mxu0 0.0
  %1467 = vmatprep.subr.mxu0 0.0
  %1468 = vmatpush1.msra.mxu0 %v1243
  %1469 = vmatprep.subr.mxu0 0.0
  %1470 = vmatpush1.msra.mxu0 %v1242
  %1471 = vmatprep.subr.mxu0 0.0
  %1472 = vmatpush1.msra.mxu0 %v1241
  %1473 = vmatprep.subr.mxu0 0.0
  %1474 = vmatpush1.msra.mxu0 %v1240
  %1475 = vmatprep.subr.mxu0 0.0
  %1476 = vmatpush2.msra.mxu0 0.0
  %1477 = vmatprep.subr.mxu0 0.0
  %1478 = vmatpush2.msra.mxu0 0.0
  %1479 = vmatprep.subr.mxu0 0.0
  %1480 = vmatpush2.msra.mxu0 0.0
  %1481 = vmatprep.subr.mxu0 0.0
  %1482 = vmatpush2.msra.mxu0 0.0
  %1483 = vmatprep.subr.mxu0 0.0
  %1484 = vmatpush2.msra.mxu0 0.0
  %1485 = vmatprep.subr.mxu0 0.0
  %1486 = vmatpush2.msra.mxu0 0.0
  %1487 = vmatprep.subr.mxu0 0.0
  %1488 = vmatpush2.msra.mxu0 0.0
  %1489 = vmatprep.subr.mxu0 0.0
  %1490 = vmatpush2.msra.mxu0 0.0
  %1491 = vmatprep.subr.mxu0 0.0
  %1492 = vmatpush2.msra.mxu0 0.0
  %1493 = vmatprep.subr.mxu0 0.0
  %1494 = vmatpush2.msra.mxu0 0.0
  %1495 = vmatprep.subr.mxu0 0.0
  %1496 = vmatpush2.msra.mxu0 0.0
  %1497 = vmatprep.subr.mxu0 0.0
  %1498 = vmatpush2.msra.mxu0 0.0
  %1499 = vmatprep.subr.mxu0 0.0
  %1500 = vmatpush2.msra.mxu0 0.0
  %1501 = vmatprep.subr.mxu0 0.0
  %1502 = vmatpush2.msra.mxu0 0.0
  %1503 = vmatprep.subr.mxu0 0.0
  %1504 = vmatpush2.msra.mxu0 0.0
  %1505 = vmatprep.subr.mxu0 0.0
  %1506 = vmatpush2.msra.mxu0 0.0
  %1507 = vmatprep.mubr.f32.mxu0 0.0
  %1508 = vmatmul.mubr.f32.gmra.mxu0 %v1441
  %v1509 = vpop.f32.mrf.mxu0
  %v1510 = vadd.f32 0.0, %v1509
  %v1511 = vpop.f32.mrf.mxu0
  %1512 = vdwg.mxu0
  %v1513 = vadd.f32 %v1437, %v1510
  %v1514 = vtanh.pop %v1513
  %v1515 = vmul.f32 %v41, %v1514
  %v1516 = vadd.f32 %v42, %v1515
  %v1517 = vmul.f32 %v1516, %v1436
  %1519 = vrot.lane.b32.xlu0 %v1516, 64
  %v1520 = vpop.permute.xlu0 %1519
  %v1522 = vmul.f32 %v1516, %v1520
  %1524 = vrot.lane.b32.xlu0 %v1522, 32
  %v1525 = vpop.permute.xlu0 %1524
  %v1527 = vadd.f32 %v1517, %v1525
  %v1528 = vtanh.pop %v1527
  %1530 = vrot.lane.b32.xlu0 %v1528, 64
  %v1531 = vpop.permute.xlu0 %1530
  %v1533 = vmul.f32 %v1516, %v1531
  %v1534 = vsel %vm530, %v1533, %v1435
  %v1535 = vsel %vm530, %v1527, %v1436
  %v1536 = vld [vmem:[#allocation2 + $0x18] sm:$0xff]
  %1538 = vrot.lane.b32.xlu0 %v1534, 32
  %v1539 = vpop.permute.xlu0 %1538
  %v1540 = vsel %vm62, %v1539, 0
  %1542 = vmatprep.subr.mxu0 0.0
  %1543 = vmatpush1.msra.mxu0 0.0
  %1544 = vmatprep.subr.mxu0 0.0
  %1545 = vmatpush1.msra.mxu0 0.0
  %1546 = vmatprep.subr.mxu0 0.0
  %1547 = vmatpush1.msra.mxu0 0.0
  %1548 = vmatprep.subr.mxu0 0.0
  %1549 = vmatpush1.msra.mxu0 0.0
  %1550 = vmatprep.subr.mxu0 0.0
  %1551 = vmatpush1.msra.mxu0 0.0
  %1552 = vmatprep.subr.mxu0 0.0
  %1553 = vmatpush1.msra.mxu0 0.0
  %1554 = vmatprep.subr.mxu0 0.0
  %1555 = vmatpush1.msra.mxu0 0.0
  %1556 = vmatprep.subr.mxu0 0.0
  %1557 = vmatpush1.msra.mxu0 0.0
  %1558 = vmatprep.subr.mxu0 0.0
  %1559 = vmatpush1.msra.mxu0 0.0
  %1560 = vmatprep.subr.mxu0 0.0
  %1561 = vmatpush1.msra.mxu0 0.0
  %1562 = vmatprep.subr.mxu0 0.0
  %1563 = vmatpush1.msra.mxu0 0.0
  %1564 = vmatprep.subr.mxu0 0.0
  %1565 = vmatpush1.msra.mxu0 0.0
  %1566 = vmatprep.subr.mxu0 0.0
  %1567 = vmatpush1.msra.mxu0 %v1243
  %1568 = vmatprep.subr.mxu0 0.0
  %1569 = vmatpush1.msra.mxu0 %v1242
  %1570 = vmatprep.subr.mxu0 0.0
  %1571 = vmatpush1.msra.mxu0 %v1241
  %1572 = vmatprep.subr.mxu0 0.0
  %1573 = vmatpush1.msra.mxu0 %v1240
  %1574 = vmatprep.subr.mxu0 0.0
  %1575 = vmatpush2.msra.mxu0 0.0
  %1576 = vmatprep.subr.mxu0 0.0
  %1577 = vmatpush2.msra.mxu0 0.0
  %1578 = vmatprep.subr.mxu0 0.0
  %1579 = vmatpush2.msra.mxu0 0.0
  %1580 = vmatprep.subr.mxu0 0.0
  %1581 = vmatpush2.msra.mxu0 0.0
  %1582 = vmatprep.subr.mxu0 0.0
  %1583 = vmatpush2.msra.mxu0 0.0
  %1584 = vmatprep.subr.mxu0 0.0
  %1585 = vmatpush2.msra.mxu0 0.0
  %1586 = vmatprep.subr.mxu0 0.0
  %1587 = vmatpush2.msra.mxu0 0.0
  %1588 = vmatprep.subr.mxu0 0.0
  %1589 = vmatpush2.msra.mxu0 0.0
  %1590 = vmatprep.subr.mxu0 0.0
  %1591 = vmatpush2.msra.mxu0 0.0
  %1592 = vmatprep.subr.mxu0 0.0
  %1593 = vmatpush2.msra.mxu0 0.0
  %1594 = vmatprep.subr.mxu0 0.0
  %1595 = vmatpush2.msra.mxu0 0.0
  %1596 = vmatprep.subr.mxu0 0.0
  %1597 = vmatpush2.msra.mxu0 0.0
  %1598 = vmatprep.subr.mxu0 0.0
  %1599 = vmatpush2.msra.mxu0 0.0
  %1600 = vmatprep.subr.mxu0 0.0
  %1601 = vmatpush2.msra.mxu0 0.0
  %1602 = vmatprep.subr.mxu0 0.0
  %1603 = vmatpush2.msra.mxu0 0.0
  %1604 = vmatprep.subr.mxu0 0.0
  %1605 = vmatpush2.msra.mxu0 0.0
  %1606 = vmatprep.mubr.f32.mxu0 0.0
  %1607 = vmatmul.mubr.f32.gmra.mxu0 %v1540
  %v1608 = vpop.f32.mrf.mxu0
  %v1609 = vadd.f32 0.0, %v1608
  %v1610 = vpop.f32.mrf.mxu0
  %1611 = vdwg.mxu0
  %v1612 = vadd.f32 %v1536, %v1609
  %v1613 = vtanh.pop %v1612
  %v1614 = vmul.f32 %v41, %v1613
  %v1615 = vadd.f32 %v42, %v1614
  %v1616 = vmul.f32 %v1615, %v1535
  %1618 = vrot.lane.b32.xlu0 %v1615, 64
  %v1619 = vpop.permute.xlu0 %1618
  %v1621 = vmul.f32 %v1615, %v1619
  %1623 = vrot.lane.b32.xlu0 %v1621, 32
  %v1624 = vpop.permute.xlu0 %1623
  %v1626 = vadd.f32 %v1616, %v1624
  %v1627 = vtanh.pop %v1626
  %1629 = vrot.lane.b32.xlu0 %v1627, 64
  %v1630 = vpop.permute.xlu0 %1629
  %v1632 = vmul.f32 %v1615, %v1630
  %v1633 = vsel %vm637, %v1632, %v1534
  %v1634 = vsel %vm637, %v1626, %v1535
  %v1635 = vld [vmem:[#allocation2 + $0x20] sm:$0xff]
  %1637 = vrot.lane.b32.xlu0 %v1633, 32
  %v1638 = vpop.permute.xlu0 %1637
  %v1639 = vsel %vm62, %v1638, 0
  %1641 = vmatprep.subr.mxu0 0.0
  %1642 = vmatpush1.msra.mxu0 0.0
  %1643 = vmatprep.subr.mxu0 0.0
  %1644 = vmatpush1.msra.mxu0 0.0
  %1645 = vmatprep.subr.mxu0 0.0
  %1646 = vmatpush1.msra.mxu0 0.0
  %1647 = vmatprep.subr.mxu0 0.0
  %1648 = vmatpush1.msra.mxu0 0.0
  %1649 = vmatprep.subr.mxu0 0.0
  %1650 = vmatpush1.msra.mxu0 0.0
  %1651 = vmatprep.subr.mxu0 0.0
  %1652 = vmatpush1.msra.mxu0 0.0
  %1653 = vmatprep.subr.mxu0 0.0
  %1654 = vmatpush1.msra.mxu0 0.0
  %1655 = vmatprep.subr.mxu0 0.0
  %1656 = vmatpush1.msra.mxu0 0.0
  %1657 = vmatprep.subr.mxu0 0.0
  %1658 = vmatpush1.msra.mxu0 0.0
  %1659 = vmatprep.subr.mxu0 0.0
  %1660 = vmatpush1.msra.mxu0 0.0
  %1661 = vmatprep.subr.mxu0 0.0
  %1662 = vmatpush1.msra.mxu0 0.0
  %1663 = vmatprep.subr.mxu0 0.0
  %1664 = vmatpush1.msra.mxu0 0.0
  %1665 = vmatprep.subr.mxu0 0.0
  %1666 = vmatpush1.msra.mxu0 %v1243
  %1667 = vmatprep.subr.mxu0 0.0
  %1668 = vmatpush1.msra.mxu0 %v1242
  %1669 = vmatprep.subr.mxu0 0.0
  %1670 = vmatpush1.msra.mxu0 %v1241
  %1671 = vmatprep.subr.mxu0 0.0
  %1672 = vmatpush1.msra.mxu0 %v1240
  %1673 = vmatprep.subr.mxu0 0.0
  %1674 = vmatpush2.msra.mxu0 0.0
  %1675 = vmatprep.subr.mxu0 0.0
  %1676 = vmatpush2.msra.mxu0 0.0
  %1677 = vmatprep.subr.mxu0 0.0
  %1678 = vmatpush2.msra.mxu0 0.0
  %1679 = vmatprep.subr.mxu0 0.0
  %1680 = vmatpush2.msra.mxu0 0.0
  %1681 = vmatprep.subr.mxu0 0.0
  %1682 = vmatpush2.msra.mxu0 0.0
  %1683 = vmatprep.subr.mxu0 0.0
  %1684 = vmatpush2.msra.mxu0 0.0
  %1685 = vmatprep.subr.mxu0 0.0
  %1686 = vmatpush2.msra.mxu0 0.0
  %1687 = vmatprep.subr.mxu0 0.0
  %1688 = vmatpush2.msra.mxu0 0.0
  %1689 = vmatprep.subr.mxu0 0.0
  %1690 = vmatpush2.msra.mxu0 0.0
  %1691 = vmatprep.subr.mxu0 0.0
  %1692 = vmatpush2.msra.mxu0 0.0
  %1693 = vmatprep.subr.mxu0 0.0
  %1694 = vmatpush2.msra.mxu0 0.0
  %1695 = vmatprep.subr.mxu0 0.0
  %1696 = vmatpush2.msra.mxu0 0.0
  %1697 = vmatprep.subr.mxu0 0.0
  %1698 = vmatpush2.msra.mxu0 0.0
  %1699 = vmatprep.subr.mxu0 0.0
  %1700 = vmatpush2.msra.mxu0 0.0
  %1701 = vmatprep.subr.mxu0 0.0
  %1702 = vmatpush2.msra.mxu0 0.0
  %1703 = vmatprep.subr.mxu0 0.0
  %1704 = vmatpush2.msra.mxu0 0.0
  %1705 = vmatprep.mubr.f32.mxu0 0.0
  %1706 = vmatmul.mubr.f32.gmra.mxu0 %v1639
  %v1707 = vpop.f32.mrf.mxu0
  %v1708 = vadd.f32 0.0, %v1707
  %v1709 = vpop.f32.mrf.mxu0
  %1710 = vdwg.mxu0
  %v1711 = vadd.f32 %v1635, %v1708
  %v1712 = vtanh.pop %v1711
  %v1713 = vmul.f32 %v41, %v1712
  %v1714 = vadd.f32 %v42, %v1713
  %v1715 = vmul.f32 %v1714, %v1634
  %1717 = vrot.lane.b32.xlu0 %v1714, 64
  %v1718 = vpop.permute.xlu0 %1717
  %v1720 = vmul.f32 %v1714, %v1718
  %1722 = vrot.lane.b32.xlu0 %v1720, 32
  %v1723 = vpop.permute.xlu0 %1722
  %v1725 = vadd.f32 %v1715, %v1723
  %v1726 = vtanh.pop %v1725
  %1728 = vrot.lane.b32.xlu0 %v1726, 64
  %v1729 = vpop.permute.xlu0 %1728
  %v1731 = vmul.f32 %v1714, %v1729
  %v1732 = vsel %vm744, %v1731, %v1633
  %v1733 = vsel %vm744, %v1725, %v1634
  %v1734 = vld [vmem:[#allocation2 + $0x28] sm:$0xff]
  %1736 = vrot.lane.b32.xlu0 %v1732, 32
  %v1737 = vpop.permute.xlu0 %1736
  %v1738 = vsel %vm62, %v1737, 0
  %1740 = vmatprep.subr.mxu0 0.0
  %1741 = vmatpush1.msra.mxu0 0.0
  %1742 = vmatprep.subr.mxu0 0.0
  %1743 = vmatpush1.msra.mxu0 0.0
  %1744 = vmatprep.subr.mxu0 0.0
  %1745 = vmatpush1.msra.mxu0 0.0
  %1746 = vmatprep.subr.mxu0 0.0
  %1747 = vmatpush1.msra.mxu0 0.0
  %1748 = vmatprep.subr.mxu0 0.0
  %1749 = vmatpush1.msra.mxu0 0.0
  %1750 = vmatprep.subr.mxu0 0.0
  %1751 = vmatpush1.msra.mxu0 0.0
  %1752 = vmatprep.subr.mxu0 0.0
  %1753 = vmatpush1.msra.mxu0 0.0
  %1754 = vmatprep.subr.mxu0 0.0
  %1755 = vmatpush1.msra.mxu0 0.0
  %1756 = vmatprep.subr.mxu0 0.0
  %1757 = vmatpush1.msra.mxu0 0.0
  %1758 = vmatprep.subr.mxu0 0.0
  %1759 = vmatpush1.msra.mxu0 0.0
  %1760 = vmatprep.subr.mxu0 0.0
  %1761 = vmatpush1.msra.mxu0 0.0
  %1762 = vmatprep.subr.mxu0 0.0
  %1763 = vmatpush1.msra.mxu0 0.0
  %1764 = vmatprep.subr.mxu0 0.0
  %1765 = vmatpush1.msra.mxu0 %v1243
  %1766 = vmatprep.subr.mxu0 0.0
  %1767 = vmatpush1.msra.mxu0 %v1242
  %1768 = vmatprep.subr.mxu0 0.0
  %1769 = vmatpush1.msra.mxu0 %v1241
  %1770 = vmatprep.subr.mxu0 0.0
  %1771 = vmatpush1.msra.mxu0 %v1240
  %1772 = vmatprep.subr.mxu0 0.0
  %1773 = vmatpush2.msra.mxu0 0.0
  %1774 = vmatprep.subr.mxu0 0.0
  %1775 = vmatpush2.msra.mxu0 0.0
  %1776 = vmatprep.subr.mxu0 0.0
  %1777 = vmatpush2.msra.mxu0 0.0
  %1778 = vmatprep.subr.mxu0 0.0
  %1779 = vmatpush2.msra.mxu0 0.0
  %1780 = vmatprep.subr.mxu0 0.0
  %1781 = vmatpush2.msra.mxu0 0.0
  %1782 = vmatprep.subr.mxu0 0.0
  %1783 = vmatpush2.msra.mxu0 0.0
  %1784 = vmatprep.subr.mxu0 0.0
  %1785 = vmatpush2.msra.mxu0 0.0
  %1786 = vmatprep.subr.mxu0 0.0
  %1787 = vmatpush2.msra.mxu0 0.0
  %1788 = vmatprep.subr.mxu0 0.0
  %1789 = vmatpush2.msra.mxu0 0.0
  %1790 = vmatprep.subr.mxu0 0.0
  %1791 = vmatpush2.msra.mxu0 0.0
  %1792 = vmatprep.subr.mxu0 0.0
  %1793 = vmatpush2.msra.mxu0 0.0
  %1794 = vmatprep.subr.mxu0 0.0
  %1795 = vmatpush2.msra.mxu0 0.0
  %1796 = vmatprep.subr.mxu0 0.0
  %1797 = vmatpush2.msra.mxu0 0.0
  %1798 = vmatprep.subr.mxu0 0.0
  %1799 = vmatpush2.msra.mxu0 0.0
  %1800 = vmatprep.subr.mxu0 0.0
  %1801 = vmatpush2.msra.mxu0 0.0
  %1802 = vmatprep.subr.mxu0 0.0
  %1803 = vmatpush2.msra.mxu0 0.0
  %1804 = vmatprep.mubr.f32.mxu0 0.0
  %1805 = vmatmul.mubr.f32.gmra.mxu0 %v1738
  %v1806 = vpop.f32.mrf.mxu0
  %v1807 = vadd.f32 0.0, %v1806
  %v1808 = vpop.f32.mrf.mxu0
  %1809 = vdwg.mxu0
  %v1810 = vadd.f32 %v1734, %v1807
  %v1811 = vtanh.pop %v1810
  %v1812 = vmul.f32 %v41, %v1811
  %v1813 = vadd.f32 %v42, %v1812
  %v1814 = vmul.f32 %v1813, %v1733
  %1816 = vrot.lane.b32.xlu0 %v1813, 64
  %v1817 = vpop.permute.xlu0 %1816
  %v1819 = vmul.f32 %v1813, %v1817
  %1821 = vrot.lane.b32.xlu0 %v1819, 32
  %v1822 = vpop.permute.xlu0 %1821
  %v1824 = vadd.f32 %v1814, %v1822
  %v1825 = vtanh.pop %v1824
  %1827 = vrot.lane.b32.xlu0 %v1825, 64
  %v1828 = vpop.permute.xlu0 %1827
  %v1830 = vmul.f32 %v1813, %v1828
  %v1831 = vsel %vm851, %v1830, %v1732
  %v1832 = vsel %vm851, %v1824, %v1733
  %v1833 = vld [vmem:[#allocation2 + $0x30] sm:$0xff]
  %1835 = vrot.lane.b32.xlu0 %v1831, 32
  %v1836 = vpop.permute.xlu0 %1835
  %v1837 = vsel %vm62, %v1836, 0
  %1839 = vmatprep.subr.mxu0 0.0
  %1840 = vmatpush1.msra.mxu0 0.0
  %1841 = vmatprep.subr.mxu0 0.0
  %1842 = vmatpush1.msra.mxu0 0.0
  %1843 = vmatprep.subr.mxu0 0.0
  %1844 = vmatpush1.msra.mxu0 0.0
  %1845 = vmatprep.subr.mxu0 0.0
  %1846 = vmatpush1.msra.mxu0 0.0
  %1847 = vmatprep.subr.mxu0 0.0
  %1848 = vmatpush1.msra.mxu0 0.0
  %1849 = vmatprep.subr.mxu0 0.0
  %1850 = vmatpush1.msra.mxu0 0.0
  %1851 = vmatprep.subr.mxu0 0.0
  %1852 = vmatpush1.msra.mxu0 0.0
  %1853 = vmatprep.subr.mxu0 0.0
  %1854 = vmatpush1.msra.mxu0 0.0
  %1855 = vmatprep.subr.mxu0 0.0
  %1856 = vmatpush1.msra.mxu0 0.0
  %1857 = vmatprep.subr.mxu0 0.0
  %1858 = vmatpush1.msra.mxu0 0.0
  %1859 = vmatprep.subr.mxu0 0.0
  %1860 = vmatpush1.msra.mxu0 0.0
  %1861 = vmatprep.subr.mxu0 0.0
  %1862 = vmatpush1.msra.mxu0 0.0
  %1863 = vmatprep.subr.mxu0 0.0
  %1864 = vmatpush1.msra.mxu0 %v1243
  %1865 = vmatprep.subr.mxu0 0.0
  %1866 = vmatpush1.msra.mxu0 %v1242
  %1867 = vmatprep.subr.mxu0 0.0
  %1868 = vmatpush1.msra.mxu0 %v1241
  %1869 = vmatprep.subr.mxu0 0.0
  %1870 = vmatpush1.msra.mxu0 %v1240
  %1871 = vmatprep.subr.mxu0 0.0
  %1872 = vmatpush2.msra.mxu0 0.0
  %1873 = vmatprep.subr.mxu0 0.0
  %1874 = vmatpush2.msra.mxu0 0.0
  %1875 = vmatprep.subr.mxu0 0.0
  %1876 = vmatpush2.msra.mxu0 0.0
  %1877 = vmatprep.subr.mxu0 0.0
  %1878 = vmatpush2.msra.mxu0 0.0
  %1879 = vmatprep.subr.mxu0 0.0
  %1880 = vmatpush2.msra.mxu0 0.0
  %1881 = vmatprep.subr.mxu0 0.0
  %1882 = vmatpush2.msra.mxu0 0.0
  %1883 = vmatprep.subr.mxu0 0.0
  %1884 = vmatpush2.msra.mxu0 0.0
  %1885 = vmatprep.subr.mxu0 0.0
  %1886 = vmatpush2.msra.mxu0 0.0
  %1887 = vmatprep.subr.mxu0 0.0
  %1888 = vmatpush2.msra.mxu0 0.0
  %1889 = vmatprep.subr.mxu0 0.0
  %1890 = vmatpush2.msra.mxu0 0.0
  %1891 = vmatprep.subr.mxu0 0.0
  %1892 = vmatpush2.msra.mxu0 0.0
  %1893 = vmatprep.subr.mxu0 0.0
  %1894 = vmatpush2.msra.mxu0 0.0
  %1895 = vmatprep.subr.mxu0 0.0
  %1896 = vmatpush2.msra.mxu0 0.0
  %1897 = vmatprep.subr.mxu0 0.0
  %1898 = vmatpush2.msra.mxu0 0.0
  %1899 = vmatprep.subr.mxu0 0.0
  %1900 = vmatpush2.msra.mxu0 0.0
  %1901 = vmatprep.subr.mxu0 0.0
  %1902 = vmatpush2.msra.mxu0 0.0
  %1903 = vmatprep.mubr.f32.mxu0 0.0
  %1904 = vmatmul.mubr.f32.gmra.mxu0 %v1837
  %v1905 = vpop.f32.mrf.mxu0
  %v1906 = vadd.f32 0.0, %v1905
  %v1907 = vpop.f32.mrf.mxu0
  %1908 = vdwg.mxu0
  %v1909 = vadd.f32 %v1833, %v1906
  %v1910 = vtanh.pop %v1909
  %v1911 = vmul.f32 %v41, %v1910
  %v1912 = vadd.f32 %v42, %v1911
  %v1913 = vmul.f32 %v1912, %v1832
  %1915 = vrot.lane.b32.xlu0 %v1912, 64
  %v1916 = vpop.permute.xlu0 %1915
  %v1918 = vmul.f32 %v1912, %v1916
  %1920 = vrot.lane.b32.xlu0 %v1918, 32
  %v1921 = vpop.permute.xlu0 %1920
  %v1923 = vadd.f32 %v1913, %v1921
  %v1924 = vtanh.pop %v1923
  %1926 = vrot.lane.b32.xlu0 %v1924, 64
  %v1927 = vpop.permute.xlu0 %1926
  %v1929 = vmul.f32 %v1912, %v1927
  %v1930 = vsel %vm958, %v1929, %v1831
  %v1931 = vsel %vm958, %v1923, %v1832
  %v1932 = vld [vmem:[#allocation2 + $0x38] sm:$0xff]
  %1934 = vrot.lane.b32.xlu0 %v1930, 32
  %v1935 = vpop.permute.xlu0 %1934
  %v1936 = vsel %vm62, %v1935, 0
  %1938 = vmatprep.subr.mxu0 0.0
  %1939 = vmatpush1.msra.mxu0 0.0
  %1940 = vmatprep.subr.mxu0 0.0
  %1941 = vmatpush1.msra.mxu0 0.0
  %1942 = vmatprep.subr.mxu0 0.0
  %1943 = vmatpush1.msra.mxu0 0.0
  %1944 = vmatprep.subr.mxu0 0.0
  %1945 = vmatpush1.msra.mxu0 0.0
  %1946 = vmatprep.subr.mxu0 0.0
  %1947 = vmatpush1.msra.mxu0 0.0
  %1948 = vmatprep.subr.mxu0 0.0
  %1949 = vmatpush1.msra.mxu0 0.0
  %1950 = vmatprep.subr.mxu0 0.0
  %1951 = vmatpush1.msra.mxu0 0.0
  %1952 = vmatprep.subr.mxu0 0.0
  %1953 = vmatpush1.msra.mxu0 0.0
  %1954 = vmatprep.subr.mxu0 0.0
  %1955 = vmatpush1.msra.mxu0 0.0
  %1956 = vmatprep.subr.mxu0 0.0
  %1957 = vmatpush1.msra.mxu0 0.0
  %1958 = vmatprep.subr.mxu0 0.0
  %1959 = vmatpush1.msra.mxu0 0.0
  %1960 = vmatprep.subr.mxu0 0.0
  %1961 = vmatpush1.msra.mxu0 0.0
  %1962 = vmatprep.subr.mxu0 0.0
  %1963 = vmatpush1.msra.mxu0 %v1243
  %1964 = vmatprep.subr.mxu0 0.0
  %1965 = vmatpush1.msra.mxu0 %v1242
  %1966 = vmatprep.subr.mxu0 0.0
  %1967 = vmatpush1.msra.mxu0 %v1241
  %1968 = vmatprep.subr.mxu0 0.0
  %1969 = vmatpush1.msra.mxu0 %v1240
  %1970 = vmatprep.subr.mxu0 0.0
  %1971 = vmatpush2.msra.mxu0 0.0
  %1972 = vmatprep.subr.mxu0 0.0
  %1973 = vmatpush2.msra.mxu0 0.0
  %1974 = vmatprep.subr.mxu0 0.0
  %1975 = vmatpush2.msra.mxu0 0.0
  %1976 = vmatprep.subr.mxu0 0.0
  %1977 = vmatpush2.msra.mxu0 0.0
  %1978 = vmatprep.subr.mxu0 0.0
  %1979 = vmatpush2.msra.mxu0 0.0
  %1980 = vmatprep.subr.mxu0 0.0
  %1981 = vmatpush2.msra.mxu0 0.0
  %1982 = vmatprep.subr.mxu0 0.0
  %1983 = vmatpush2.msra.mxu0 0.0
  %1984 = vmatprep.subr.mxu0 0.0
  %1985 = vmatpush2.msra.mxu0 0.0
  %1986 = vmatprep.subr.mxu0 0.0
  %1987 = vmatpush2.msra.mxu0 0.0
  %1988 = vmatprep.subr.mxu0 0.0
  %1989 = vmatpush2.msra.mxu0 0.0
  %1990 = vmatprep.subr.mxu0 0.0
  %1991 = vmatpush2.msra.mxu0 0.0
  %1992 = vmatprep.subr.mxu0 0.0
  %1993 = vmatpush2.msra.mxu0 0.0
  %1994 = vmatprep.subr.mxu0 0.0
  %1995 = vmatpush2.msra.mxu0 0.0
  %1996 = vmatprep.subr.mxu0 0.0
  %1997 = vmatpush2.msra.mxu0 0.0
  %1998 = vmatprep.subr.mxu0 0.0
  %1999 = vmatpush2.msra.mxu0 0.0
  %2000 = vmatprep.subr.mxu0 0.0
  %2001 = vmatpush2.msra.mxu0 0.0
  %2002 = vmatprep.mubr.f32.mxu0 0.0
  %2003 = vmatmul.mubr.f32.gmra.mxu0 %v1936
  %v2004 = vpop.f32.mrf.mxu0
  %v2005 = vadd.f32 0.0, %v2004
  %v2006 = vpop.f32.mrf.mxu0
  %2007 = vdwg.mxu0
  %v2008 = vadd.f32 %v1932, %v2005
  %v2009 = vtanh.pop %v2008
  %v2010 = vmul.f32 %v41, %v2009
  %v2011 = vadd.f32 %v42, %v2010
  %v2012 = vmul.f32 %v2011, %v1931
  %2014 = vrot.lane.b32.xlu0 %v2011, 64
  %v2015 = vpop.permute.xlu0 %2014
  %v2017 = vmul.f32 %v2011, %v2015
  %2019 = vrot.lane.b32.xlu0 %v2017, 32
  %v2020 = vpop.permute.xlu0 %2019
  %v2022 = vadd.f32 %v2012, %v2020
  %v2023 = vtanh.pop %v2022
  %2025 = vrot.lane.b32.xlu0 %v2023, 64
  %v2026 = vpop.permute.xlu0 %2025
  %v2028 = vmul.f32 %v2011, %v2026
  %v2029 = vsel %vm1065, %v2028, %v1930
  %v2030 = vld [vmem:[%s8] sm:$0xff]
  %v2031 = vld [vmem:[%s8 + $0x8] sm:$0xff]
  %v2032 = vld [vmem:[%s8 + $0x10] sm:$0xff]
  %v2033 = vld [vmem:[%s8 + $0x18] sm:$0xff]
  %v2034 = vld [vmem:[%s9] sm:$0x1]
  %v2036 = vlaneseq
  %v2037 = vshrl.u32 %v2036, 7
  %v2038 = vsub.s32 0, %v2037
  %v2039 = vrot.slane %v2034, %v2038
  %2042 = vrot.lane.b32.xlu0 %v2029, 32
  %v2043 = vpop.permute.xlu0 %2042
  %v2044 = vsel %vm62, %v2043, 0
  %2046 = vmatprep.subr.mxu0 0.0
  %2047 = vmatpush1.msra.mxu0 0.0
  %2048 = vmatprep.subr.mxu0 0.0
  %2049 = vmatpush1.msra.mxu0 0.0
  %2050 = vmatprep.subr.mxu0 0.0
  %2051 = vmatpush1.msra.mxu0 0.0
  %2052 = vmatprep.subr.mxu0 0.0
  %2053 = vmatpush1.msra.mxu0 0.0
  %2054 = vmatprep.subr.mxu0 0.0
  %2055 = vmatpush1.msra.mxu0 0.0
  %2056 = vmatprep.subr.mxu0 0.0
  %2057 = vmatpush1.msra.mxu0 0.0
  %2058 = vmatprep.subr.mxu0 0.0
  %2059 = vmatpush1.msra.mxu0 0.0
  %2060 = vmatprep.subr.mxu0 0.0
  %2061 = vmatpush1.msra.mxu0 0.0
  %2062 = vmatprep.subr.mxu0 0.0
  %2063 = vmatpush1.msra.mxu0 0.0
  %2064 = vmatprep.subr.mxu0 0.0
  %2065 = vmatpush1.msra.mxu0 0.0
  %2066 = vmatprep.subr.mxu0 0.0
  %2067 = vmatpush1.msra.mxu0 0.0
  %2068 = vmatprep.subr.mxu0 0.0
  %2069 = vmatpush1.msra.mxu0 0.0
  %2070 = vmatprep.subr.mxu0 0.0
  %2071 = vmatpush1.msra.mxu0 %v2033
  %2072 = vmatprep.subr.mxu0 0.0
  %2073 = vmatpush1.msra.mxu0 %v2032
  %2074 = vmatprep.subr.mxu0 0.0
  %2075 = vmatpush1.msra.mxu0 %v2031
  %2076 = vmatprep.subr.mxu0 0.0
  %2077 = vmatpush1.msra.mxu0 %v2030
  %2078 = vmatprep.subr.mxu0 0.0
  %2079 = vmatpush2.msra.mxu0 0.0
  %2080 = vmatprep.subr.mxu0 0.0
  %2081 = vmatpush2.msra.mxu0 0.0
  %2082 = vmatprep.subr.mxu0 0.0
  %2083 = vmatpush2.msra.mxu0 0.0
  %2084 = vmatprep.subr.mxu0 0.0
  %2085 = vmatpush2.msra.mxu0 0.0
  %2086 = vmatprep.subr.mxu0 0.0
  %2087 = vmatpush2.msra.mxu0 0.0
  %2088 = vmatprep.subr.mxu0 0.0
  %2089 = vmatpush2.msra.mxu0 0.0
  %2090 = vmatprep.subr.mxu0 0.0
  %2091 = vmatpush2.msra.mxu0 0.0
  %2092 = vmatprep.subr.mxu0 0.0
  %2093 = vmatpush2.msra.mxu0 0.0
  %2094 = vmatprep.subr.mxu0 0.0
  %2095 = vmatpush2.msra.mxu0 0.0
  %2096 = vmatprep.subr.mxu0 0.0
  %2097 = vmatpush2.msra.mxu0 0.0
  %2098 = vmatprep.subr.mxu0 0.0
  %2099 = vmatpush2.msra.mxu0 0.0
  %2100 = vmatprep.subr.mxu0 0.0
  %2101 = vmatpush2.msra.mxu0 0.0
  %2102 = vmatprep.subr.mxu0 0.0
  %2103 = vmatpush2.msra.mxu0 0.0
  %2104 = vmatprep.subr.mxu0 0.0
  %2105 = vmatpush2.msra.mxu0 0.0
  %2106 = vmatprep.subr.mxu0 0.0
  %2107 = vmatpush2.msra.mxu0 0.0
  %2108 = vmatprep.subr.mxu0 0.0
  %2109 = vmatpush2.msra.mxu0 0.0
  %2110 = vmatprep.mubr.f32.mxu0 0.0
  %2111 = vmatmul.mubr.f32.gmra.mxu0 %v2044
  %v2112 = vpop.f32.mrf.mxu0
  %v2113 = vadd.f32 %v2039, %v2112
  %v2114 = vpop.f32.mrf.mxu0
  %2115 = vdwg.mxu0
  %vm2116 = vcmask 15360
  %2117 = vst.msk [vmem:[%s10] sm:$0xff] %vm2116, %v2113
  // Predicated region
  $region42: #{lstm_model_forward.1} parent=0 // pred_check
    _
  $region43: #{lstm_model_forward.1} parent=0 // pred_check_branch
    %2119 = sbr.rel (0) target = $region45
  $region44: #{lstm_model_forward.1} parent=0 // pred_region
    _
  $region45: #{lstm_model_forward.1} parent=0 // pred_fallthru
    _
  // Predicated region
  $region46: #{lstm_model_forward.1} parent=0 // pred_check
    _
  $region47: #{lstm_model_forward.1} parent=0 // pred_check_branch
    %2121 = sbr.rel (0) target = $region49
  $region48: #{lstm_model_forward.1} parent=0 // pred_region
    _
  $region49: #{lstm_model_forward.1} parent=0 // pred_fallthru
    _

</llo_original>
